<compile_context>
chip_gen: v5e
topology: v5e:2x2
jax: 0.10.0
libtpu: 0.0.40
codegen_flags: <defaults>
</compile_context>

<pallas_src>
import functools

import jax
import jax.numpy as jnp
from jax.experimental import pallas as pl
from jax.experimental.pallas import tpu as pltpu


_MXU_DTYPE = jnp.bfloat16   # MXU input dtype for weight matmuls (f32 accumulate)


def _gelu(x):
    # tanh-approx GELU (PyTorch nn.GELU() uses erf; tanh form maps onto the TPU EUP).
    c = 0.7978845608028654  # sqrt(2/pi)
    return 0.5 * x * (1.0 + jnp.tanh(c * (x + 0.044715 * x * x * x)))


def _mxdot(a, b):
    # bf16 MXU inputs, f32 accumulation; elementwise math around it stays f32.
    return jnp.dot(a.astype(_MXU_DTYPE), b.astype(_MXU_DTYPE),
                   preferred_element_type=jnp.float32)


# ----------------------------- fused Pallas kernel -----------------------------

def _mdgcn_block_kernel(xy_ref, mask_ref, wxm_ref, wrel_ref, bmr_ref,
                        wfc_ref, bfc_ref, w1_ref, b1_ref, w2_ref, b2_ref,
                        out_ref, *, n_x, inner_k, cross_k):
    xy = xy_ref[0]                                           # (P, C) f32, VMEM-resident
    P = xy.shape[0]
    L = wxm_ref.shape[0]

    # ---------- kNN over the concatenated [x; y] graph (in-kernel) ----------
    # TODO(synk): source of `knn(x, y, inner_k, cross_k)` not provided; assumed:
    # per node, inner_k nearest (sq. euclidean, self included) from its own modality
    # and cross_k nearest from the other modality.
    gram = jax.lax.dot_general(xy, xy, (((1,), (1,)), ((), ())),
                               preferred_element_type=jnp.float32)      # (P, P)
    sq = jnp.sum(xy * xy, axis=-1, keepdims=True)                       # (P, 1)
    # per-row constant ||x_i||^2 dropped: only row-wise ordering feeds top-k.
    d = jnp.transpose(sq) - 2.0 * gram                                  # (P, P)

    col = jax.lax.broadcasted_iota(jnp.int32, (P, P), 1)
    row = jax.lax.broadcasted_iota(jnp.int32, (P, P), 0)
    same = (row < n_x) == (col < n_x)                                   # same-modality mask
    BIG = jnp.float32(3.0e38)

    def select_min(dcur):
        # per-row minimum (first occurrence on ties) -> one-hot gather matrix
        dmin = jnp.min(dcur, axis=-1, keepdims=True)                    # (P, 1)
        first = jnp.min(jnp.where(dcur <= dmin, col, P),
                        axis=-1, keepdims=True)                         # (P, 1) int32
        onehot = col == first                                           # (P, P) bool
        return onehot.astype(jnp.float32), jnp.where(onehot, BIG, dcur)

    onehots = []                                  # built once, reused by all conv layers
    d_in = jnp.where(same, d, BIG)
    for _ in range(inner_k):
        oh, d_in = select_min(d_in)
        onehots.append(oh)
    d_cr = jnp.where(same, BIG, d)
    for _ in range(cross_k):
        oh, d_cr = select_min(d_cr)
        onehots.append(oh)

    # ---------- MDyGraphConv2d: conv_times x (MRConv2d + BN + GELU) + residual ----------
    res_xy = xy                                                          # MGrapher residual
    for l in range(L):
        # neighbor max: g = max_k(x_{j_k}) (gather via one-hot MXU matmuls, f32 exact)
        g = jnp.dot(onehots[0], xy, preferred_element_type=jnp.float32)
        for oh in onehots[1:]:
            g = jnp.maximum(g, jnp.dot(oh, xy, preferred_element_type=jnp.float32))
        # x@wx + (g - x)@wrel  ==  x@(wx - wrel) + g@wrel   (wxm = wx - wrel, pre-folded)
        pre = _mxdot(xy, wxm_ref[l]) + _mxdot(g, wrel_ref[l]) + bmr_ref[l]
        xy = _gelu(pre) + xy                                             # per-layer "+ xy"

    # ---------- MGrapher.fc (1x1 conv + BN, folded) + residual; x/y merged ----------
    xy = _mxdot(xy, wfc_ref[...]) + bfc_ref[0] + res_xy

    # ---------- FFN: (conv + BN + GELU) x 2 + residual, then isolated-vertex mask ----------
    # TODO(synk): mask_isolatedVertex source not provided; assumed to zero masked vertices.
    h = _gelu(_mxdot(xy, w1_ref[...]) + b1_ref[0])
    o = _gelu(_mxdot(h, w2_ref[...]) + b2_ref[0]) + xy
    out_ref[0] = o * mask_ref[0]                                         # (P, 1) bcast over C


def mdgcn_block(xy, mask, wxm, wrel, bmr, wfc, bfc, w1, b1, w2, b2,
                *, n_x, inner_k, cross_k):
    B, P, C = xy.shape
    L = wxm.shape[0]
    H = w1.shape[1]
    kernel = functools.partial(_mdgcn_block_kernel,
                               n_x=n_x, inner_k=inner_k, cross_k=cross_k)
    full2 = lambda i: (0, 0)
    full3 = lambda i: (0, 0, 0)
    return pl.pallas_call(
        kernel,
        out_shape=jax.ShapeDtypeStruct((B, P, C), jnp.float32),
        grid=(B,),
        in_specs=[
            pl.BlockSpec((1, P, C), lambda i: (i, 0, 0)),   # xy (per-batch slab)
            pl.BlockSpec((1, P, 1), lambda i: (i, 0, 0)),   # mask
            pl.BlockSpec((L, C, C), full3),                 # MRConv wx - wrel (stacked)
            pl.BlockSpec((L, C, C), full3),                 # MRConv wrel      (stacked)
            pl.BlockSpec((L, 1, C), full3),                 # MRConv bias      (stacked)
            pl.BlockSpec((C, C), full2),                    # fc weight
            pl.BlockSpec((1, C), full2),                    # fc bias
            pl.BlockSpec((C, H), full2),                    # ffn w1
            pl.BlockSpec((1, H), full2),                    # ffn b1
            pl.BlockSpec((H, C), full2),                    # ffn w2
            pl.BlockSpec((1, C), full2),                    # ffn b2
        ],
        out_specs=pl.BlockSpec((1, P, C), lambda i: (i, 0, 0)),
        compiler_params=pltpu.CompilerParams(dimension_semantics=("parallel",)),
    )(xy, mask, wxm, wrel, bmr, wfc, bfc, w1, b1, w2, b2)


# ----------------------------- params (BN folded) -----------------------------

def _fold_bn(key, w, b, eps=1e-5):
    # Fold an inference-mode BatchNorm2d (deterministic synthetic stats) into a
    # preceding 1x1 conv: y = (x @ W^T + b - mean) * gamma/sqrt(var+eps) + beta
    c_out = w.shape[0]
    k1, k2, k3, k4 = jax.random.split(key, 4)
    gamma = 1.0 + 0.1 * jax.random.normal(k1, (c_out,), jnp.float32)
    beta = 0.05 * jax.random.normal(k2, (c_out,), jnp.float32)
    mean = 0.1 * jax.random.normal(k3, (c_out,), jnp.float32)
    var = jax.random.uniform(k4, (c_out,), jnp.float32, 0.5, 1.5)
    scale = gamma / jnp.sqrt(var + eps)
    return w * scale[:, None], (b - mean) * scale + beta


def _conv1x1(key, c_out, c_in):
    kw, kb = jax.random.split(key)
    w = jax.random.normal(kw, (c_out, c_in), jnp.float32) / jnp.sqrt(jnp.float32(c_in))
    b = 0.01 * jax.random.normal(kb, (c_out,), jnp.float32)
    return w, b


def init_params(key, C, conv_times):
    H = 4 * C
    keys = jax.random.split(key, 2 * conv_times + 6)
    it = iter(keys)
    wxm_l, wrel_l, bmr_l = [], [], []
    for _ in range(conv_times):
        # MRConv2d: Conv2d(2C -> C, 1) + BN + GELU; channels interleaved
        # [x_c0, rel_c0, x_c1, rel_c1, ...] as in the cat+reshape of MRConv2d.
        w, b = _conv1x1(next(it), C, 2 * C)
        w, b = _fold_bn(next(it), w, b)
        wx = jnp.transpose(w[:, 0::2])                       # (C, C), used as x @ wx
        wrel = jnp.transpose(w[:, 1::2])                     # (C, C)
        wxm_l.append(wx - wrel)                              # folded: x@(wx-wrel) + g@wrel
        wrel_l.append(wrel)
        bmr_l.append(b[None, :])                             # (1, C)
    params = {"mr": {"wxm": jnp.stack(wxm_l),                # (L, C, C)
                     "wrel": jnp.stack(wrel_l),              # (L, C, C)
                     "b": jnp.stack(bmr_l)}}                 # (L, 1, C)
    # MGrapher.fc: Conv2d(C -> C, 1) + BN (shared between x and y branches)
    w, b = _conv1x1(next(it), C, C)
    w, b = _fold_bn(next(it), w, b)
    params["fc"] = {"w": jnp.transpose(w), "b": b[None, :]}
    # FFN: Conv2d(C -> 4C) + BN + GELU, Conv2d(4C -> C) + BN + GELU
    w1, b1 = _conv1x1(next(it), H, C)
    w1, b1 = _fold_bn(next(it), w1, b1)
    w2, b2 = _conv1x1(next(it), C, H)
    w2, b2 = _fold_bn(next(it), w2, b2)
    params["ffn"] = {"w1": jnp.transpose(w1), "b1": b1[None, :],
                     "w2": jnp.transpose(w2), "b2": b2[None, :]}
    return params


# ----------------------------- forward (thin XLA glue) -----------------------------

def mdgcn_block_forward(params, x_nchw, x_mask, y_nchw, y_mask,
                        inner_k=4, cross_k=2):
    # x_nchw: (B, C, N, 1), y_nchw: (B, C, M, 1), masks: (B, N) / (B, M)
    x = jnp.transpose(x_nchw[..., 0], (0, 2, 1)).astype(jnp.float32)    # (B, N, C)
    y = jnp.transpose(y_nchw[..., 0], (0, 2, 1)).astype(jnp.float32)    # (B, M, C)
    B, N, C = x.shape
    M = y.shape[1]

    xy = jnp.concatenate([x, y], axis=1)                                # (B, P, C)
    mask = jnp.concatenate([x_mask, y_mask], axis=1)
    mask = mask.astype(jnp.float32)[:, :, None]                         # (B, P, 1)

    out = mdgcn_block(xy, mask,
                      params["mr"]["wxm"], params["mr"]["wrel"], params["mr"]["b"],
                      params["fc"]["w"], params["fc"]["b"],
                      params["ffn"]["w1"], params["ffn"]["b1"],
                      params["ffn"]["w2"], params["ffn"]["b2"],
                      n_x=N, inner_k=inner_k, cross_k=cross_k)          # single Pallas call

    x_out = jnp.transpose(out[:, :N], (0, 2, 1))[..., None]             # back to NCHW
    y_out = jnp.transpose(out[:, N:], (0, 2, 1))[..., None]
    return x_out, y_out


if __name__ == "__main__":
    B, C, N, M = 2, 32, 16, 12
    conv_times, inner_k, cross_k = 2, 4, 2

    key = jax.random.PRNGKey(0)
    kp, kx, ky, kmx, kmy = jax.random.split(key, 5)
    params = init_params(kp, C, conv_times)

    x = jax.random.normal(kx, (B, C, N, 1), jnp.float32)
    y = jax.random.normal(ky, (B, C, M, 1), jnp.float32)
    x_mask = (jax.random.uniform(kmx, (B, N)) > 0.2).astype(jnp.float32)
    y_mask = (jax.random.uniform(kmy, (B, M)) > 0.2).astype(jnp.float32)

    fwd = jax.jit(functools.partial(mdgcn_block_forward,
                                    inner_k=inner_k, cross_k=cross_k))
    x_out, y_out = fwd(params, x, x_mask, y, y_mask)
    jax.block_until_ready((x_out, y_out))
    assert x_out.shape == (B, C, N, 1) and y_out.shape == (B, C, M, 1)
    assert jnp.all(jnp.isfinite(x_out)) and jnp.all(jnp.isfinite(y_out))
    print("KERNEL_OK")
</pallas_src>

<mosaic_0001>
module attributes {stable_mosaic.version = 11 : i64} {
  func.func @_mdgcn_block_kernel(%arg0: i32, %arg1: memref<1x28x32xf32, #tpu.memory_space<vmem>>, %arg2: memref<1x28x1xf32, #tpu.memory_space<vmem>>, %arg3: memref<2x32x32xf32, #tpu.memory_space<vmem>>, %arg4: memref<2x32x32xf32, #tpu.memory_space<vmem>>, %arg5: memref<2x1x32xf32, #tpu.memory_space<vmem>>, %arg6: memref<32x32xf32, #tpu.memory_space<vmem>>, %arg7: memref<1x32xf32, #tpu.memory_space<vmem>>, %arg8: memref<32x128xf32, #tpu.memory_space<vmem>>, %arg9: memref<1x128xf32, #tpu.memory_space<vmem>>, %arg10: memref<128x32xf32, #tpu.memory_space<vmem>>, %arg11: memref<1x32xf32, #tpu.memory_space<vmem>>, %arg12: memref<1x28x32xf32, #tpu.memory_space<vmem>>) attributes {dimension_semantics = [#tpu.dimension_semantics<parallel>], iteration_bounds = array<i64: 2>, scalar_prefetch = 0 : i64, scratch_operands = 0 : i64, tpu.core_type = #tpu.core_type<tc>, window_params = [{transform_indices = @transform_0, window_bounds = array<i64: 1, 28, 32>}, {transform_indices = @transform_1, window_bounds = array<i64: 1, 28, 1>}, {pipeline_mode = #tpu.pipeline_mode<synchronous>, transform_indices = @transform_2, window_bounds = array<i64: 2, 32, 32>}, {pipeline_mode = #tpu.pipeline_mode<synchronous>, transform_indices = @transform_3, window_bounds = array<i64: 2, 32, 32>}, {pipeline_mode = #tpu.pipeline_mode<synchronous>, transform_indices = @transform_4, window_bounds = array<i64: 2, 1, 32>}, {pipeline_mode = #tpu.pipeline_mode<synchronous>, transform_indices = @transform_5, window_bounds = array<i64: 32, 32>}, {pipeline_mode = #tpu.pipeline_mode<synchronous>, transform_indices = @transform_6, window_bounds = array<i64: 1, 32>}, {pipeline_mode = #tpu.pipeline_mode<synchronous>, transform_indices = @transform_7, window_bounds = array<i64: 32, 128>}, {pipeline_mode = #tpu.pipeline_mode<synchronous>, transform_indices = @transform_8, window_bounds = array<i64: 1, 128>}, {pipeline_mode = #tpu.pipeline_mode<synchronous>, transform_indices = @transform_9, window_bounds = array<i64: 128, 32>}, {pipeline_mode = #tpu.pipeline_mode<synchronous>, transform_indices = @transform_10, window_bounds = array<i64: 1, 32>}, {transform_indices = @transform_11, window_bounds = array<i64: 1, 28, 32>}]} {
    %c0 = arith.constant 0 : index
    %c0_0 = arith.constant 0 : index
    %c0_1 = arith.constant 0 : index
    %0 = vector.load %arg1[%c0, %c0_0, %c0_1] : memref<1x28x32xf32, #tpu.memory_space<vmem>>, vector<1x28x32xf32>
    %1 = vector.shape_cast %0 : vector<1x28x32xf32> to vector<28x32xf32>
    %cst = arith.constant dense<0.000000e+00> : vector<28x28xf32>
    %2 = tpu.matmul %1, %1, %cst {dimension_numbers = #tpu.dot_dimension_numbers<[1], [1], [0], [0], [0, 0, 1, 0], [], []>} : vector<28x32xf32>, vector<28x32xf32>, vector<28x28xf32> -> vector<28x28xf32>
    %3 = arith.mulf %1, %1 : vector<28x32xf32>
    %cst_2 = arith.constant dense<0.000000e+00> : vector<28xf32>
    %4 = vector.multi_reduction <add>, %3, %cst_2 [1] : vector<28x32xf32> to vector<28xf32>
    %5 = vector.shape_cast %4 : vector<28xf32> to vector<28x1xf32>
    %6 = tpu.transpose %5, [1, 0] : vector<28x1xf32> -> vector<1x28xf32>
    %cst_3 = arith.constant 2.000000e+00 : f32
    %7 = vector.broadcast %cst_3 : f32 to vector<28x28xf32>
    %8 = arith.mulf %7, %2 : vector<28x28xf32>
    %9 = vector.broadcast %6 : vector<1x28xf32> to vector<28x28xf32>
    %10 = arith.subf %9, %8 : vector<28x28xf32>
    %11 = tpu.iota {dimensions = array<i32: 1>} : vector<28x28xi32>
    %12 = tpu.iota {dimensions = array<i32: 0>} : vector<28x28xi32>
    %c16_i32 = arith.constant 16 : i32
    %13 = vector.broadcast %c16_i32 : i32 to vector<28x28xi32>
    %14 = arith.cmpi slt, %12, %13 : vector<28x28xi32>
    %c16_i32_4 = arith.constant 16 : i32
    %15 = vector.broadcast %c16_i32_4 : i32 to vector<28x28xi32>
    %16 = arith.cmpi slt, %11, %15 : vector<28x28xi32>
    %17 = arith.xori %14, %16 : vector<28x28xi1>
    %cst_5 = arith.constant dense<true> : vector<28x28xi1>
    %18 = arith.xori %17, %cst_5 : vector<28x28xi1>
    %cst_6 = arith.constant 3.000000e+38 : f32
    %19 = vector.broadcast %cst_6 : f32 to vector<28x28xf32>
    %20 = arith.select %18, %10, %19 : vector<28x28xi1>, vector<28x28xf32>
    %cst_7 = arith.constant dense<0x7F800000> : vector<28xf32>
    %21 = vector.multi_reduction <minimumf>, %20, %cst_7 [1] : vector<28x28xf32> to vector<28xf32>
    %22 = vector.shape_cast %21 : vector<28xf32> to vector<28x1xf32>
    %23 = vector.broadcast %22 : vector<28x1xf32> to vector<28x28xf32>
    %24 = arith.cmpf ole, %20, %23 : vector<28x28xf32>
    %c28_i32 = arith.constant 28 : i32
    %25 = vector.broadcast %c28_i32 : i32 to vector<28x28xi32>
    %26 = arith.select %24, %11, %25 : vector<28x28xi1>, vector<28x28xi32>
    %cst_8 = arith.constant dense<2147483647> : vector<28xi32>
    %27 = vector.multi_reduction <minsi>, %26, %cst_8 [1] : vector<28x28xi32> to vector<28xi32>
    %28 = vector.shape_cast %27 : vector<28xi32> to vector<28x1xi32>
    %29 = vector.broadcast %28 : vector<28x1xi32> to vector<28x28xi32>
    %30 = arith.cmpi eq, %11, %29 : vector<28x28xi32>
    %31 = arith.extui %30 : vector<28x28xi1> to vector<28x28xi32>
    %32 = arith.sitofp %31 : vector<28x28xi32> to vector<28x28xf32>
    %cst_9 = arith.constant 3.000000e+38 : f32
    %33 = vector.broadcast %cst_9 : f32 to vector<28x28xf32>
    %34 = arith.select %30, %33, %20 : vector<28x28xi1>, vector<28x28xf32>
    %cst_10 = arith.constant dense<0x7F800000> : vector<28xf32>
    %35 = vector.multi_reduction <minimumf>, %34, %cst_10 [1] : vector<28x28xf32> to vector<28xf32>
    %36 = vector.shape_cast %35 : vector<28xf32> to vector<28x1xf32>
    %37 = vector.broadcast %36 : vector<28x1xf32> to vector<28x28xf32>
    %38 = arith.cmpf ole, %34, %37 : vector<28x28xf32>
    %c28_i32_11 = arith.constant 28 : i32
    %39 = vector.broadcast %c28_i32_11 : i32 to vector<28x28xi32>
    %40 = arith.select %38, %11, %39 : vector<28x28xi1>, vector<28x28xi32>
    %cst_12 = arith.constant dense<2147483647> : vector<28xi32>
    %41 = vector.multi_reduction <minsi>, %40, %cst_12 [1] : vector<28x28xi32> to vector<28xi32>
    %42 = vector.shape_cast %41 : vector<28xi32> to vector<28x1xi32>
    %43 = vector.broadcast %42 : vector<28x1xi32> to vector<28x28xi32>
    %44 = arith.cmpi eq, %11, %43 : vector<28x28xi32>
    %45 = arith.extui %44 : vector<28x28xi1> to vector<28x28xi32>
    %46 = arith.sitofp %45 : vector<28x28xi32> to vector<28x28xf32>
    %cst_13 = arith.constant 3.000000e+38 : f32
    %47 = vector.broadcast %cst_13 : f32 to vector<28x28xf32>
    %48 = arith.select %44, %47, %34 : vector<28x28xi1>, vector<28x28xf32>
    %cst_14 = arith.constant dense<0x7F800000> : vector<28xf32>
    %49 = vector.multi_reduction <minimumf>, %48, %cst_14 [1] : vector<28x28xf32> to vector<28xf32>
    %50 = vector.shape_cast %49 : vector<28xf32> to vector<28x1xf32>
    %51 = vector.broadcast %50 : vector<28x1xf32> to vector<28x28xf32>
    %52 = arith.cmpf ole, %48, %51 : vector<28x28xf32>
    %c28_i32_15 = arith.constant 28 : i32
    %53 = vector.broadcast %c28_i32_15 : i32 to vector<28x28xi32>
    %54 = arith.select %52, %11, %53 : vector<28x28xi1>, vector<28x28xi32>
    %cst_16 = arith.constant dense<2147483647> : vector<28xi32>
    %55 = vector.multi_reduction <minsi>, %54, %cst_16 [1] : vector<28x28xi32> to vector<28xi32>
    %56 = vector.shape_cast %55 : vector<28xi32> to vector<28x1xi32>
    %57 = vector.broadcast %56 : vector<28x1xi32> to vector<28x28xi32>
    %58 = arith.cmpi eq, %11, %57 : vector<28x28xi32>
    %59 = arith.extui %58 : vector<28x28xi1> to vector<28x28xi32>
    %60 = arith.sitofp %59 : vector<28x28xi32> to vector<28x28xf32>
    %cst_17 = arith.constant 3.000000e+38 : f32
    %61 = vector.broadcast %cst_17 : f32 to vector<28x28xf32>
    %62 = arith.select %58, %61, %48 : vector<28x28xi1>, vector<28x28xf32>
    %cst_18 = arith.constant dense<0x7F800000> : vector<28xf32>
    %63 = vector.multi_reduction <minimumf>, %62, %cst_18 [1] : vector<28x28xf32> to vector<28xf32>
    %64 = vector.shape_cast %63 : vector<28xf32> to vector<28x1xf32>
    %65 = vector.broadcast %64 : vector<28x1xf32> to vector<28x28xf32>
    %66 = arith.cmpf ole, %62, %65 : vector<28x28xf32>
    %c28_i32_19 = arith.constant 28 : i32
    %67 = vector.broadcast %c28_i32_19 : i32 to vector<28x28xi32>
    %68 = arith.select %66, %11, %67 : vector<28x28xi1>, vector<28x28xi32>
    %cst_20 = arith.constant dense<2147483647> : vector<28xi32>
    %69 = vector.multi_reduction <minsi>, %68, %cst_20 [1] : vector<28x28xi32> to vector<28xi32>
    %70 = vector.shape_cast %69 : vector<28xi32> to vector<28x1xi32>
    %71 = vector.broadcast %70 : vector<28x1xi32> to vector<28x28xi32>
    %72 = arith.cmpi eq, %11, %71 : vector<28x28xi32>
    %73 = arith.extui %72 : vector<28x28xi1> to vector<28x28xi32>
    %74 = arith.sitofp %73 : vector<28x28xi32> to vector<28x28xf32>
    %cst_21 = arith.constant 3.000000e+38 : f32
    %75 = vector.broadcast %cst_21 : f32 to vector<28x28xf32>
    %76 = arith.select %18, %75, %10 : vector<28x28xi1>, vector<28x28xf32>
    %cst_22 = arith.constant dense<0x7F800000> : vector<28xf32>
    %77 = vector.multi_reduction <minimumf>, %76, %cst_22 [1] : vector<28x28xf32> to vector<28xf32>
    %78 = vector.shape_cast %77 : vector<28xf32> to vector<28x1xf32>
    %79 = vector.broadcast %78 : vector<28x1xf32> to vector<28x28xf32>
    %80 = arith.cmpf ole, %76, %79 : vector<28x28xf32>
    %c28_i32_23 = arith.constant 28 : i32
    %81 = vector.broadcast %c28_i32_23 : i32 to vector<28x28xi32>
    %82 = arith.select %80, %11, %81 : vector<28x28xi1>, vector<28x28xi32>
    %cst_24 = arith.constant dense<2147483647> : vector<28xi32>
    %83 = vector.multi_reduction <minsi>, %82, %cst_24 [1] : vector<28x28xi32> to vector<28xi32>
    %84 = vector.shape_cast %83 : vector<28xi32> to vector<28x1xi32>
    %85 = vector.broadcast %84 : vector<28x1xi32> to vector<28x28xi32>
    %86 = arith.cmpi eq, %11, %85 : vector<28x28xi32>
    %87 = arith.extui %86 : vector<28x28xi1> to vector<28x28xi32>
    %88 = arith.sitofp %87 : vector<28x28xi32> to vector<28x28xf32>
    %cst_25 = arith.constant 3.000000e+38 : f32
    %89 = vector.broadcast %cst_25 : f32 to vector<28x28xf32>
    %90 = arith.select %86, %89, %76 : vector<28x28xi1>, vector<28x28xf32>
    %cst_26 = arith.constant dense<0x7F800000> : vector<28xf32>
    %91 = vector.multi_reduction <minimumf>, %90, %cst_26 [1] : vector<28x28xf32> to vector<28xf32>
    %92 = vector.shape_cast %91 : vector<28xf32> to vector<28x1xf32>
    %93 = vector.broadcast %92 : vector<28x1xf32> to vector<28x28xf32>
    %94 = arith.cmpf ole, %90, %93 : vector<28x28xf32>
    %c28_i32_27 = arith.constant 28 : i32
    %95 = vector.broadcast %c28_i32_27 : i32 to vector<28x28xi32>
    %96 = arith.select %94, %11, %95 : vector<28x28xi1>, vector<28x28xi32>
    %cst_28 = arith.constant dense<2147483647> : vector<28xi32>
    %97 = vector.multi_reduction <minsi>, %96, %cst_28 [1] : vector<28x28xi32> to vector<28xi32>
    %98 = vector.shape_cast %97 : vector<28xi32> to vector<28x1xi32>
    %99 = vector.broadcast %98 : vector<28x1xi32> to vector<28x28xi32>
    %100 = arith.cmpi eq, %11, %99 : vector<28x28xi32>
    %101 = arith.extui %100 : vector<28x28xi1> to vector<28x28xi32>
    %102 = arith.sitofp %101 : vector<28x28xi32> to vector<28x28xf32>
    %cst_29 = arith.constant dense<0.000000e+00> : vector<28x32xf32>
    %103 = tpu.matmul %32, %1, %cst_29 {dimension_numbers = #tpu.dot_dimension_numbers<[1], [0], [0], [1], [0, 0, 1, 1], [], []>} : vector<28x28xf32>, vector<28x32xf32>, vector<28x32xf32> -> vector<28x32xf32>
    %cst_30 = arith.constant dense<0.000000e+00> : vector<28x32xf32>
    %104 = tpu.matmul %46, %1, %cst_30 {dimension_numbers = #tpu.dot_dimension_numbers<[1], [0], [0], [1], [0, 0, 1, 1], [], []>} : vector<28x28xf32>, vector<28x32xf32>, vector<28x32xf32> -> vector<28x32xf32>
    %105 = arith.maximumf %103, %104 : vector<28x32xf32>
    %cst_31 = arith.constant dense<0.000000e+00> : vector<28x32xf32>
    %106 = tpu.matmul %60, %1, %cst_31 {dimension_numbers = #tpu.dot_dimension_numbers<[1], [0], [0], [1], [0, 0, 1, 1], [], []>} : vector<28x28xf32>, vector<28x32xf32>, vector<28x32xf32> -> vector<28x32xf32>
    %107 = arith.maximumf %105, %106 : vector<28x32xf32>
    %cst_32 = arith.constant dense<0.000000e+00> : vector<28x32xf32>
    %108 = tpu.matmul %74, %1, %cst_32 {dimension_numbers = #tpu.dot_dimension_numbers<[1], [0], [0], [1], [0, 0, 1, 1], [], []>} : vector<28x28xf32>, vector<28x32xf32>, vector<28x32xf32> -> vector<28x32xf32>
    %109 = arith.maximumf %107, %108 : vector<28x32xf32>
    %cst_33 = arith.constant dense<0.000000e+00> : vector<28x32xf32>
    %110 = tpu.matmul %88, %1, %cst_33 {dimension_numbers = #tpu.dot_dimension_numbers<[1], [0], [0], [1], [0, 0, 1, 1], [], []>} : vector<28x28xf32>, vector<28x32xf32>, vector<28x32xf32> -> vector<28x32xf32>
    %111 = arith.maximumf %109, %110 : vector<28x32xf32>
    %cst_34 = arith.constant dense<0.000000e+00> : vector<28x32xf32>
    %112 = tpu.matmul %102, %1, %cst_34 {dimension_numbers = #tpu.dot_dimension_numbers<[1], [0], [0], [1], [0, 0, 1, 1], [], []>} : vector<28x28xf32>, vector<28x32xf32>, vector<28x32xf32> -> vector<28x32xf32>
    %113 = arith.maximumf %111, %112 : vector<28x32xf32>
    %c0_35 = arith.constant 0 : index
    %c0_36 = arith.constant 0 : index
    %c0_37 = arith.constant 0 : index
    %114 = vector.load %arg3[%c0_35, %c0_36, %c0_37] : memref<2x32x32xf32, #tpu.memory_space<vmem>>, vector<1x32x32xf32>
    %115 = vector.shape_cast %114 : vector<1x32x32xf32> to vector<32x32xf32>
    %116 = arith.truncf %1 : vector<28x32xf32> to vector<28x32xbf16>
    %117 = arith.truncf %115 : vector<32x32xf32> to vector<32x32xbf16>
    %cst_38 = arith.constant dense<0.000000e+00> : vector<28x32xf32>
    %118 = tpu.matmul %116, %117, %cst_38 {dimension_numbers = #tpu.dot_dimension_numbers<[1], [0], [0], [1], [0, 0, 1, 1], [], []>} : vector<28x32xbf16>, vector<32x32xbf16>, vector<28x32xf32> -> vector<28x32xf32>
    %c0_39 = arith.constant 0 : index
    %c0_40 = arith.constant 0 : index
    %c0_41 = arith.constant 0 : index
    %119 = vector.load %arg4[%c0_39, %c0_40, %c0_41] : memref<2x32x32xf32, #tpu.memory_space<vmem>>, vector<1x32x32xf32>
    %120 = vector.shape_cast %119 : vector<1x32x32xf32> to vector<32x32xf32>
    %121 = arith.truncf %113 : vector<28x32xf32> to vector<28x32xbf16>
    %122 = arith.truncf %120 : vector<32x32xf32> to vector<32x32xbf16>
    %cst_42 = arith.constant dense<0.000000e+00> : vector<28x32xf32>
    %123 = tpu.matmul %121, %122, %cst_42 {dimension_numbers = #tpu.dot_dimension_numbers<[1], [0], [0], [1], [0, 0, 1, 1], [], []>} : vector<28x32xbf16>, vector<32x32xbf16>, vector<28x32xf32> -> vector<28x32xf32>
    %124 = arith.addf %118, %123 : vector<28x32xf32>
    %c0_43 = arith.constant 0 : index
    %c0_44 = arith.constant 0 : index
    %c0_45 = arith.constant 0 : index
    %125 = vector.load %arg5[%c0_43, %c0_44, %c0_45] : memref<2x1x32xf32, #tpu.memory_space<vmem>>, vector<1x1x32xf32>
    %126 = vector.shape_cast %125 : vector<1x1x32xf32> to vector<1x32xf32>
    %127 = vector.broadcast %126 : vector<1x32xf32> to vector<28x32xf32>
    %128 = arith.addf %124, %127 : vector<28x32xf32>
    %cst_46 = arith.constant 5.000000e-01 : f32
    %129 = vector.broadcast %cst_46 : f32 to vector<28x32xf32>
    %130 = arith.mulf %129, %128 : vector<28x32xf32>
    %cst_47 = arith.constant 4.471500e-02 : f32
    %131 = vector.broadcast %cst_47 : f32 to vector<28x32xf32>
    %132 = arith.mulf %131, %128 : vector<28x32xf32>
    %133 = arith.mulf %132, %128 : vector<28x32xf32>
    %134 = arith.mulf %133, %128 : vector<28x32xf32>
    %135 = arith.addf %128, %134 : vector<28x32xf32>
    %cst_48 = arith.constant 0.797884583 : f32
    %136 = vector.broadcast %cst_48 : f32 to vector<28x32xf32>
    %137 = arith.mulf %136, %135 : vector<28x32xf32>
    %138 = math.tanh %137 : vector<28x32xf32>
    %cst_49 = arith.constant 1.000000e+00 : f32
    %139 = vector.broadcast %cst_49 : f32 to vector<28x32xf32>
    %140 = arith.addf %139, %138 : vector<28x32xf32>
    %141 = arith.mulf %130, %140 : vector<28x32xf32>
    %142 = arith.addf %141, %1 : vector<28x32xf32>
    %cst_50 = arith.constant dense<0.000000e+00> : vector<28x32xf32>
    %143 = tpu.matmul %32, %142, %cst_50 {dimension_numbers = #tpu.dot_dimension_numbers<[1], [0], [0], [1], [0, 0, 1, 1], [], []>} : vector<28x28xf32>, vector<28x32xf32>, vector<28x32xf32> -> vector<28x32xf32>
    %cst_51 = arith.constant dense<0.000000e+00> : vector<28x32xf32>
    %144 = tpu.matmul %46, %142, %cst_51 {dimension_numbers = #tpu.dot_dimension_numbers<[1], [0], [0], [1], [0, 0, 1, 1], [], []>} : vector<28x28xf32>, vector<28x32xf32>, vector<28x32xf32> -> vector<28x32xf32>
    %145 = arith.maximumf %143, %144 : vector<28x32xf32>
    %cst_52 = arith.constant dense<0.000000e+00> : vector<28x32xf32>
    %146 = tpu.matmul %60, %142, %cst_52 {dimension_numbers = #tpu.dot_dimension_numbers<[1], [0], [0], [1], [0, 0, 1, 1], [], []>} : vector<28x28xf32>, vector<28x32xf32>, vector<28x32xf32> -> vector<28x32xf32>
    %147 = arith.maximumf %145, %146 : vector<28x32xf32>
    %cst_53 = arith.constant dense<0.000000e+00> : vector<28x32xf32>
    %148 = tpu.matmul %74, %142, %cst_53 {dimension_numbers = #tpu.dot_dimension_numbers<[1], [0], [0], [1], [0, 0, 1, 1], [], []>} : vector<28x28xf32>, vector<28x32xf32>, vector<28x32xf32> -> vector<28x32xf32>
    %149 = arith.maximumf %147, %148 : vector<28x32xf32>
    %cst_54 = arith.constant dense<0.000000e+00> : vector<28x32xf32>
    %150 = tpu.matmul %88, %142, %cst_54 {dimension_numbers = #tpu.dot_dimension_numbers<[1], [0], [0], [1], [0, 0, 1, 1], [], []>} : vector<28x28xf32>, vector<28x32xf32>, vector<28x32xf32> -> vector<28x32xf32>
    %151 = arith.maximumf %149, %150 : vector<28x32xf32>
    %cst_55 = arith.constant dense<0.000000e+00> : vector<28x32xf32>
    %152 = tpu.matmul %102, %142, %cst_55 {dimension_numbers = #tpu.dot_dimension_numbers<[1], [0], [0], [1], [0, 0, 1, 1], [], []>} : vector<28x28xf32>, vector<28x32xf32>, vector<28x32xf32> -> vector<28x32xf32>
    %153 = arith.maximumf %151, %152 : vector<28x32xf32>
    %c1 = arith.constant 1 : index
    %c0_56 = arith.constant 0 : index
    %c0_57 = arith.constant 0 : index
    %154 = vector.load %arg3[%c1, %c0_56, %c0_57] : memref<2x32x32xf32, #tpu.memory_space<vmem>>, vector<1x32x32xf32>
    %155 = vector.shape_cast %154 : vector<1x32x32xf32> to vector<32x32xf32>
    %156 = arith.truncf %142 : vector<28x32xf32> to vector<28x32xbf16>
    %157 = arith.truncf %155 : vector<32x32xf32> to vector<32x32xbf16>
    %cst_58 = arith.constant dense<0.000000e+00> : vector<28x32xf32>
    %158 = tpu.matmul %156, %157, %cst_58 {dimension_numbers = #tpu.dot_dimension_numbers<[1], [0], [0], [1], [0, 0, 1, 1], [], []>} : vector<28x32xbf16>, vector<32x32xbf16>, vector<28x32xf32> -> vector<28x32xf32>
    %c1_59 = arith.constant 1 : index
    %c0_60 = arith.constant 0 : index
    %c0_61 = arith.constant 0 : index
    %159 = vector.load %arg4[%c1_59, %c0_60, %c0_61] : memref<2x32x32xf32, #tpu.memory_space<vmem>>, vector<1x32x32xf32>
    %160 = vector.shape_cast %159 : vector<1x32x32xf32> to vector<32x32xf32>
    %161 = arith.truncf %153 : vector<28x32xf32> to vector<28x32xbf16>
    %162 = arith.truncf %160 : vector<32x32xf32> to vector<32x32xbf16>
    %cst_62 = arith.constant dense<0.000000e+00> : vector<28x32xf32>
    %163 = tpu.matmul %161, %162, %cst_62 {dimension_numbers = #tpu.dot_dimension_numbers<[1], [0], [0], [1], [0, 0, 1, 1], [], []>} : vector<28x32xbf16>, vector<32x32xbf16>, vector<28x32xf32> -> vector<28x32xf32>
    %164 = arith.addf %158, %163 : vector<28x32xf32>
    %c1_63 = arith.constant 1 : index
    %c0_64 = arith.constant 0 : index
    %c0_65 = arith.constant 0 : index
    %165 = vector.load %arg5[%c1_63, %c0_64, %c0_65] : memref<2x1x32xf32, #tpu.memory_space<vmem>>, vector<1x1x32xf32>
    %166 = vector.shape_cast %165 : vector<1x1x32xf32> to vector<1x32xf32>
    %167 = vector.broadcast %166 : vector<1x32xf32> to vector<28x32xf32>
    %168 = arith.addf %164, %167 : vector<28x32xf32>
    %cst_66 = arith.constant 5.000000e-01 : f32
    %169 = vector.broadcast %cst_66 : f32 to vector<28x32xf32>
    %170 = arith.mulf %169, %168 : vector<28x32xf32>
    %cst_67 = arith.constant 4.471500e-02 : f32
    %171 = vector.broadcast %cst_67 : f32 to vector<28x32xf32>
    %172 = arith.mulf %171, %168 : vector<28x32xf32>
    %173 = arith.mulf %172, %168 : vector<28x32xf32>
    %174 = arith.mulf %173, %168 : vector<28x32xf32>
    %175 = arith.addf %168, %174 : vector<28x32xf32>
    %cst_68 = arith.constant 0.797884583 : f32
    %176 = vector.broadcast %cst_68 : f32 to vector<28x32xf32>
    %177 = arith.mulf %176, %175 : vector<28x32xf32>
    %178 = math.tanh %177 : vector<28x32xf32>
    %cst_69 = arith.constant 1.000000e+00 : f32
    %179 = vector.broadcast %cst_69 : f32 to vector<28x32xf32>
    %180 = arith.addf %179, %178 : vector<28x32xf32>
    %181 = arith.mulf %170, %180 : vector<28x32xf32>
    %182 = arith.addf %181, %142 : vector<28x32xf32>
    %c0_70 = arith.constant 0 : index
    %c0_71 = arith.constant 0 : index
    %183 = vector.load %arg6[%c0_70, %c0_71] : memref<32x32xf32, #tpu.memory_space<vmem>>, vector<32x32xf32>
    %184 = arith.truncf %182 : vector<28x32xf32> to vector<28x32xbf16>
    %185 = arith.truncf %183 : vector<32x32xf32> to vector<32x32xbf16>
    %cst_72 = arith.constant dense<0.000000e+00> : vector<28x32xf32>
    %186 = tpu.matmul %184, %185, %cst_72 {dimension_numbers = #tpu.dot_dimension_numbers<[1], [0], [0], [1], [0, 0, 1, 1], [], []>} : vector<28x32xbf16>, vector<32x32xbf16>, vector<28x32xf32> -> vector<28x32xf32>
    %c0_73 = arith.constant 0 : index
    %c0_74 = arith.constant 0 : index
    %187 = vector.load %arg7[%c0_73, %c0_74] : memref<1x32xf32, #tpu.memory_space<vmem>>, vector<1x32xf32>
    %188 = vector.shape_cast %187 : vector<1x32xf32> to vector<32xf32>
    %189 = vector.shape_cast %188 : vector<32xf32> to vector<1x32xf32>
    %190 = vector.broadcast %189 : vector<1x32xf32> to vector<28x32xf32>
    %191 = arith.addf %186, %190 : vector<28x32xf32>
    %192 = arith.addf %191, %1 : vector<28x32xf32>
    %c0_75 = arith.constant 0 : index
    %c0_76 = arith.constant 0 : index
    %193 = vector.load %arg8[%c0_75, %c0_76] : memref<32x128xf32, #tpu.memory_space<vmem>>, vector<32x128xf32>
    %194 = arith.truncf %192 : vector<28x32xf32> to vector<28x32xbf16>
    %195 = arith.truncf %193 : vector<32x128xf32> to vector<32x128xbf16>
    %cst_77 = arith.constant dense<0.000000e+00> : vector<28x128xf32>
    %196 = tpu.matmul %194, %195, %cst_77 {dimension_numbers = #tpu.dot_dimension_numbers<[1], [0], [0], [1], [0, 0, 1, 1], [], []>} : vector<28x32xbf16>, vector<32x128xbf16>, vector<28x128xf32> -> vector<28x128xf32>
    %c0_78 = arith.constant 0 : index
    %c0_79 = arith.constant 0 : index
    %197 = vector.load %arg9[%c0_78, %c0_79] : memref<1x128xf32, #tpu.memory_space<vmem>>, vector<1x128xf32>
    %198 = vector.shape_cast %197 : vector<1x128xf32> to vector<128xf32>
    %199 = vector.shape_cast %198 : vector<128xf32> to vector<1x128xf32>
    %200 = vector.broadcast %199 : vector<1x128xf32> to vector<28x128xf32>
    %201 = arith.addf %196, %200 : vector<28x128xf32>
    %cst_80 = arith.constant 5.000000e-01 : f32
    %202 = vector.broadcast %cst_80 : f32 to vector<28x128xf32>
    %203 = arith.mulf %202, %201 : vector<28x128xf32>
    %cst_81 = arith.constant 4.471500e-02 : f32
    %204 = vector.broadcast %cst_81 : f32 to vector<28x128xf32>
    %205 = arith.mulf %204, %201 : vector<28x128xf32>
    %206 = arith.mulf %205, %201 : vector<28x128xf32>
    %207 = arith.mulf %206, %201 : vector<28x128xf32>
    %208 = arith.addf %201, %207 : vector<28x128xf32>
    %cst_82 = arith.constant 0.797884583 : f32
    %209 = vector.broadcast %cst_82 : f32 to vector<28x128xf32>
    %210 = arith.mulf %209, %208 : vector<28x128xf32>
    %211 = math.tanh %210 : vector<28x128xf32>
    %cst_83 = arith.constant 1.000000e+00 : f32
    %212 = vector.broadcast %cst_83 : f32 to vector<28x128xf32>
    %213 = arith.addf %212, %211 : vector<28x128xf32>
    %214 = arith.mulf %203, %213 : vector<28x128xf32>
    %c0_84 = arith.constant 0 : index
    %c0_85 = arith.constant 0 : index
    %215 = vector.load %arg10[%c0_84, %c0_85] : memref<128x32xf32, #tpu.memory_space<vmem>>, vector<128x32xf32>
    %216 = arith.truncf %214 : vector<28x128xf32> to vector<28x128xbf16>
    %217 = arith.truncf %215 : vector<128x32xf32> to vector<128x32xbf16>
    %cst_86 = arith.constant dense<0.000000e+00> : vector<28x32xf32>
    %218 = tpu.matmul %216, %217, %cst_86 {dimension_numbers = #tpu.dot_dimension_numbers<[1], [0], [0], [1], [0, 0, 1, 1], [], []>} : vector<28x128xbf16>, vector<128x32xbf16>, vector<28x32xf32> -> vector<28x32xf32>
    %c0_87 = arith.constant 0 : index
    %c0_88 = arith.constant 0 : index
    %219 = vector.load %arg11[%c0_87, %c0_88] : memref<1x32xf32, #tpu.memory_space<vmem>>, vector<1x32xf32>
    %220 = vector.shape_cast %219 : vector<1x32xf32> to vector<32xf32>
    %221 = vector.shape_cast %220 : vector<32xf32> to vector<1x32xf32>
    %222 = vector.broadcast %221 : vector<1x32xf32> to vector<28x32xf32>
    %223 = arith.addf %218, %222 : vector<28x32xf32>
    %cst_89 = arith.constant 5.000000e-01 : f32
    %224 = vector.broadcast %cst_89 : f32 to vector<28x32xf32>
    %225 = arith.mulf %224, %223 : vector<28x32xf32>
    %cst_90 = arith.constant 4.471500e-02 : f32
    %226 = vector.broadcast %cst_90 : f32 to vector<28x32xf32>
    %227 = arith.mulf %226, %223 : vector<28x32xf32>
    %228 = arith.mulf %227, %223 : vector<28x32xf32>
    %229 = arith.mulf %228, %223 : vector<28x32xf32>
    %230 = arith.addf %223, %229 : vector<28x32xf32>
    %cst_91 = arith.constant 0.797884583 : f32
    %231 = vector.broadcast %cst_91 : f32 to vector<28x32xf32>
    %232 = arith.mulf %231, %230 : vector<28x32xf32>
    %233 = math.tanh %232 : vector<28x32xf32>
    %cst_92 = arith.constant 1.000000e+00 : f32
    %234 = vector.broadcast %cst_92 : f32 to vector<28x32xf32>
    %235 = arith.addf %234, %233 : vector<28x32xf32>
    %236 = arith.mulf %225, %235 : vector<28x32xf32>
    %237 = arith.addf %236, %192 : vector<28x32xf32>
    %c0_93 = arith.constant 0 : index
    %c0_94 = arith.constant 0 : index
    %c0_95 = arith.constant 0 : index
    %238 = vector.load %arg2[%c0_93, %c0_94, %c0_95] : memref<1x28x1xf32, #tpu.memory_space<vmem>>, vector<1x28x1xf32>
    %239 = vector.shape_cast %238 : vector<1x28x1xf32> to vector<28x1xf32>
    %240 = vector.broadcast %239 : vector<28x1xf32> to vector<28x32xf32>
    %241 = arith.mulf %237, %240 : vector<28x32xf32>
    %c0_96 = arith.constant 0 : index
    %c0_97 = arith.constant 0 : index
    %c0_98 = arith.constant 0 : index
    %242 = vector.load %arg12[%c0_96, %c0_97, %c0_98] : memref<1x28x32xf32, #tpu.memory_space<vmem>>, vector<1x28x32xf32>
    %243 = vector.shape_cast %242 : vector<1x28x32xf32> to vector<28x32xf32>
    %244 = vector.shape_cast %241 : vector<28x32xf32> to vector<1x28x32xf32>
    tpu.vector_store %arg12[%c0_96, %c0_97, %c0_98], %244 {strides = array<i32>} : memref<1x28x32xf32, #tpu.memory_space<vmem>>, vector<1x28x32xf32>,
    return
  }
  func.func @transform_0(%arg0: i32) -> (i32, i32, i32) {
    %c0_i32 = arith.constant 0 : i32
    %c0_i32_0 = arith.constant 0 : i32
    %c0_i32_1 = arith.constant 0 : i32
    return %arg0, %c0_i32, %c0_i32_0 : i32, i32, i32
  }
  func.func @transform_1(%arg0: i32) -> (i32, i32, i32) {
    %c0_i32 = arith.constant 0 : i32
    %c0_i32_0 = arith.constant 0 : i32
    %c0_i32_1 = arith.constant 0 : i32
    return %arg0, %c0_i32, %c0_i32_0 : i32, i32, i32
  }
  func.func @transform_2(%arg0: i32) -> (i32, i32, i32) {
    %c0_i32 = arith.constant 0 : i32
    %c0_i32_0 = arith.constant 0 : i32
    %c0_i32_1 = arith.constant 0 : i32
    %c0_i32_2 = arith.constant 0 : i32
    return %c0_i32, %c0_i32_0, %c0_i32_1 : i32, i32, i32
  }
  func.func @transform_3(%arg0: i32) -> (i32, i32, i32) {
    %c0_i32 = arith.constant 0 : i32
    %c0_i32_0 = arith.constant 0 : i32
    %c0_i32_1 = arith.constant 0 : i32
    %c0_i32_2 = arith.constant 0 : i32
    return %c0_i32, %c0_i32_0, %c0_i32_1 : i32, i32, i32
  }
  func.func @transform_4(%arg0: i32) -> (i32, i32, i32) {
    %c0_i32 = arith.constant 0 : i32
    %c0_i32_0 = arith.constant 0 : i32
    %c0_i32_1 = arith.constant 0 : i32
    %c0_i32_2 = arith.constant 0 : i32
    return %c0_i32, %c0_i32_0, %c0_i32_1 : i32, i32, i32
  }
  func.func @transform_5(%arg0: i32) -> (i32, i32) {
    %c0_i32 = arith.constant 0 : i32
    %c0_i32_0 = arith.constant 0 : i32
    %c0_i32_1 = arith.constant 0 : i32
    return %c0_i32, %c0_i32_0 : i32, i32
  }
  func.func @transform_6(%arg0: i32) -> (i32, i32) {
    %c0_i32 = arith.constant 0 : i32
    %c0_i32_0 = arith.constant 0 : i32
    %c0_i32_1 = arith.constant 0 : i32
    return %c0_i32, %c0_i32_0 : i32, i32
  }
  func.func @transform_7(%arg0: i32) -> (i32, i32) {
    %c0_i32 = arith.constant 0 : i32
    %c0_i32_0 = arith.constant 0 : i32
    %c0_i32_1 = arith.constant 0 : i32
    return %c0_i32, %c0_i32_0 : i32, i32
  }
  func.func @transform_8(%arg0: i32) -> (i32, i32) {
    %c0_i32 = arith.constant 0 : i32
    %c0_i32_0 = arith.constant 0 : i32
    %c0_i32_1 = arith.constant 0 : i32
    return %c0_i32, %c0_i32_0 : i32, i32
  }
  func.func @transform_9(%arg0: i32) -> (i32, i32) {
    %c0_i32 = arith.constant 0 : i32
    %c0_i32_0 = arith.constant 0 : i32
    %c0_i32_1 = arith.constant 0 : i32
    return %c0_i32, %c0_i32_0 : i32, i32
  }
  func.func @transform_10(%arg0: i32) -> (i32, i32) {
    %c0_i32 = arith.constant 0 : i32
    %c0_i32_0 = arith.constant 0 : i32
    %c0_i32_1 = arith.constant 0 : i32
    return %c0_i32, %c0_i32_0 : i32, i32
  }
  func.func @transform_11(%arg0: i32) -> (i32, i32, i32) {
    %c0_i32 = arith.constant 0 : i32
    %c0_i32_0 = arith.constant 0 : i32
    %c0_i32_1 = arith.constant 0 : i32
    return %arg0, %c0_i32, %c0_i32_0 : i32, i32, i32
  }
}

</mosaic_0001>

<llo_original>
// kernel: mdgcn_block_forward.1
$region0: #{mdgcn_block_forward.1}
  #allocation0 [shape = 'u32[]', space=smem, size = 0x4, offset = 0x4, fixed_abs, tag = 'smem constant byte address 0x4 - core index']
  #allocation1 [shape = 'u32[72,128]{1,0:T(1,128)}', space=vmem, size = 0x9000, scoped, tag = 'internal scratch']
  %s0 = inlined_call_operand.vmem [shape: f32[2,28,32], index: 0, kind: input, shape index: {}]
  %s1 = inlined_call_operand.vmem [shape: f32[2,28,1], index: 1, kind: input, shape index: {}]
  %s2 = inlined_call_operand.vmem [shape: f32[2,32,32], index: 2, kind: input, shape index: {}]
  %s3 = inlined_call_operand.vmem [shape: f32[2,32,32], index: 3, kind: input, shape index: {}]
  %s4 = inlined_call_operand.vmem [shape: f32[2,1,32], index: 4, kind: input, shape index: {}]
  %s5 = inlined_call_operand.vmem [shape: f32[32,32], index: 5, kind: input, shape index: {}]
  %s6 = inlined_call_operand.vmem [shape: f32[1,32], index: 6, kind: input, shape index: {}]
  %s7 = inlined_call_operand.vmem [shape: f32[32,128], index: 7, kind: input, shape index: {}]
  %s8 = inlined_call_operand.vmem [shape: f32[1,128], index: 8, kind: input, shape index: {}]
  %s9 = inlined_call_operand.vmem [shape: f32[128,32], index: 9, kind: input, shape index: {}]
  %s10 = inlined_call_operand.vmem [shape: f32[1,32], index: 10, kind: input, shape index: {}]
  %s11 = inlined_call_operand.vmem [shape: f32[2,28,32], index: 11, kind: output, shape index: {}]
  %s12 = sld [smem:[#allocation0]]
  $region77: #{mdgcn_block_forward.1} parent=0
    _
  %s14 = ssub.s32 1, %s12
  %s15 = scalar_select 0, %s14, %s12
  loop: start=0, step=1, limit=4
  $region2: #{mdgcn_block_forward.1} parent=0 // loop_pre_header
    _
  $region3: #{mdgcn_block_forward.1} parent=0 // loop_header
    %s17 = sphi 0, %s21
    %p18 = scmp.ge.s32.totalorder %s17, 4
    %s27 = sphi 0, %s29
    %s30 = sphi 0, %s27
    %s31 = sphi 0, %s30
    %s47 = sphi 0, %s31
    %s53 = sphi 0, %s55
    %s56 = sphi 0, %s53
    %s57 = sphi 0, %s56
    %s73 = sphi 0, %s57
    %s77 = sphi 0, %s77
    %s79 = sphi 0, %s77
    %s80 = sphi 0, %s79
    %s94 = sphi 0, %s80
    %s98 = sphi 0, %s98
    %s100 = sphi 0, %s98
    %s101 = sphi 0, %s100
    %s115 = sphi 0, %s101
    %s119 = sphi 0, %s119
    %s121 = sphi 0, %s119
    %s122 = sphi 0, %s121
    %s136 = sphi 0, %s122
    %s140 = sphi 0, %s140
    %s142 = sphi 0, %s140
    %s143 = sphi 0, %s142
    %s157 = sphi 0, %s143
    %s161 = sphi 0, %s161
    %s163 = sphi 0, %s161
    %s164 = sphi 0, %s163
    %s178 = sphi 0, %s164
    %s182 = sphi 0, %s182
    %s184 = sphi 0, %s182
    %s185 = sphi 0, %s184
    %s199 = sphi 0, %s185
    %s203 = sphi 0, %s203
    %s205 = sphi 0, %s203
    %s206 = sphi 0, %s205
    %s220 = sphi 0, %s206
    %s224 = sphi 0, %s224
    %s226 = sphi 0, %s224
    %s227 = sphi 0, %s226
    %s241 = sphi 0, %s227
    %s245 = sphi 0, %s245
    %s247 = sphi 0, %s245
    %s248 = sphi 0, %s247
    %s262 = sphi 0, %s248
    %s268 = sphi 0, %s270
    %s271 = sphi 0, %s268
    %s272 = sphi 0, %s271
    %s288 = sphi 0, %s272
  $region4: #{mdgcn_block_forward.1} parent=0 // loop_header_branch
    %20 = sbr.rel (%p18) target = $region8
  $region5: #{mdgcn_block_forward.1} parent=0 // loop_body
    %s22 = ssub.s32 %s17, 1
    %s23 = ssub.s32 %s17, 2
    %s24 = sadd.s32 %s17, 1
    %s25 = ssub.s32 %s17, %s24
    %p26 = scmp.eq.s32.totalorder %s25, 0
    %s28 = sadd.s32 %s27, 1
    %s29 = scalar_select %p26, %s27, %s28
    %p32 = pneg %p26
    %p33 = scmp.eq.s32.totalorder %s17, 1
    %p34 = por %p32, %p33
    %p35 = scmp.ne.s32.totalorder %s27, %s30
    %p36 = scmp.eq.s32.totalorder %s17, 0
    %p37 = por %p35, %p36
    %p38 = scmp.ne.s32.totalorder %s27, %s30
    %p39 = scmp.eq.s32.totalorder %s22, 1
    %p40 = por %p38, %p39
    %p41 = scmp.ne.s32.totalorder %s30, %s31
    %p42 = scmp.eq.s32.totalorder %s22, 0
    %p43 = por %p41, %p42
    %p44 = scmp.ne.s32.totalorder %s30, %s31
    %p45 = scmp.eq.s32.totalorder %s23, 1
    %p46 = por %p44, %p45
    %p48 = scmp.ne.s32.totalorder %s31, %s47
    %p49 = scmp.eq.s32.totalorder %s23, 0
    %p50 = por %p48, %p49
    %s51 = ssub.s32 %s17, %s24
    %p52 = scmp.eq.s32.totalorder %s51, 0
    %s54 = sadd.s32 %s53, 1
    %s55 = scalar_select %p52, %s53, %s54
    %p58 = pneg %p52
    %p59 = scmp.eq.s32.totalorder %s17, 1
    %p60 = por %p58, %p59
    %p61 = scmp.ne.s32.totalorder %s53, %s56
    %p62 = scmp.eq.s32.totalorder %s17, 0
    %p63 = por %p61, %p62
    %p64 = scmp.ne.s32.totalorder %s53, %s56
    %p65 = scmp.eq.s32.totalorder %s22, 1
    %p66 = por %p64, %p65
    %p67 = scmp.ne.s32.totalorder %s56, %s57
    %p68 = scmp.eq.s32.totalorder %s22, 0
    %p69 = por %p67, %p68
    %p70 = scmp.ne.s32.totalorder %s56, %s57
    %p71 = scmp.eq.s32.totalorder %s23, 1
    %p72 = por %p70, %p71
    %p74 = scmp.ne.s32.totalorder %s57, %s73
    %p75 = scmp.eq.s32.totalorder %s23, 0
    %p76 = por %p74, %p75
    %s78 = sadd.s32 %s77, 1
    %p81 = scmp.eq.s32.totalorder %s17, 1
    %p82 = scmp.ne.s32.totalorder %s77, %s79
    %p83 = scmp.eq.s32.totalorder %s17, 0
    %p84 = por %p82, %p83
    %p85 = scmp.ne.s32.totalorder %s77, %s79
    %p86 = scmp.eq.s32.totalorder %s22, 1
    %p87 = por %p85, %p86
    %p88 = scmp.ne.s32.totalorder %s79, %s80
    %p89 = scmp.eq.s32.totalorder %s22, 0
    %p90 = por %p88, %p89
    %p91 = scmp.ne.s32.totalorder %s79, %s80
    %p92 = scmp.eq.s32.totalorder %s23, 1
    %p93 = por %p91, %p92
    %p95 = scmp.ne.s32.totalorder %s80, %s94
    %p96 = scmp.eq.s32.totalorder %s23, 0
    %p97 = por %p95, %p96
    %s99 = sadd.s32 %s98, 1
    %p102 = scmp.eq.s32.totalorder %s17, 1
    %p103 = scmp.ne.s32.totalorder %s98, %s100
    %p104 = scmp.eq.s32.totalorder %s17, 0
    %p105 = por %p103, %p104
    %p106 = scmp.ne.s32.totalorder %s98, %s100
    %p107 = scmp.eq.s32.totalorder %s22, 1
    %p108 = por %p106, %p107
    %p109 = scmp.ne.s32.totalorder %s100, %s101
    %p110 = scmp.eq.s32.totalorder %s22, 0
    %p111 = por %p109, %p110
    %p112 = scmp.ne.s32.totalorder %s100, %s101
    %p113 = scmp.eq.s32.totalorder %s23, 1
    %p114 = por %p112, %p113
    %p116 = scmp.ne.s32.totalorder %s101, %s115
    %p117 = scmp.eq.s32.totalorder %s23, 0
    %p118 = por %p116, %p117
    %s120 = sadd.s32 %s119, 1
    %p123 = scmp.eq.s32.totalorder %s17, 1
    %p124 = scmp.ne.s32.totalorder %s119, %s121
    %p125 = scmp.eq.s32.totalorder %s17, 0
    %p126 = por %p124, %p125
    %p127 = scmp.ne.s32.totalorder %s119, %s121
    %p128 = scmp.eq.s32.totalorder %s22, 1
    %p129 = por %p127, %p128
    %p130 = scmp.ne.s32.totalorder %s121, %s122
    %p131 = scmp.eq.s32.totalorder %s22, 0
    %p132 = por %p130, %p131
    %p133 = scmp.ne.s32.totalorder %s121, %s122
    %p134 = scmp.eq.s32.totalorder %s23, 1
    %p135 = por %p133, %p134
    %p137 = scmp.ne.s32.totalorder %s122, %s136
    %p138 = scmp.eq.s32.totalorder %s23, 0
    %p139 = por %p137, %p138
    %s141 = sadd.s32 %s140, 1
    %p144 = scmp.eq.s32.totalorder %s17, 1
    %p145 = scmp.ne.s32.totalorder %s140, %s142
    %p146 = scmp.eq.s32.totalorder %s17, 0
    %p147 = por %p145, %p146
    %p148 = scmp.ne.s32.totalorder %s140, %s142
    %p149 = scmp.eq.s32.totalorder %s22, 1
    %p150 = por %p148, %p149
    %p151 = scmp.ne.s32.totalorder %s142, %s143
    %p152 = scmp.eq.s32.totalorder %s22, 0
    %p153 = por %p151, %p152
    %p154 = scmp.ne.s32.totalorder %s142, %s143
    %p155 = scmp.eq.s32.totalorder %s23, 1
    %p156 = por %p154, %p155
    %p158 = scmp.ne.s32.totalorder %s143, %s157
    %p159 = scmp.eq.s32.totalorder %s23, 0
    %p160 = por %p158, %p159
    %s162 = sadd.s32 %s161, 1
    %p165 = scmp.eq.s32.totalorder %s17, 1
    %p166 = scmp.ne.s32.totalorder %s161, %s163
    %p167 = scmp.eq.s32.totalorder %s17, 0
    %p168 = por %p166, %p167
    %p169 = scmp.ne.s32.totalorder %s161, %s163
    %p170 = scmp.eq.s32.totalorder %s22, 1
    %p171 = por %p169, %p170
    %p172 = scmp.ne.s32.totalorder %s163, %s164
    %p173 = scmp.eq.s32.totalorder %s22, 0
    %p174 = por %p172, %p173
    %p175 = scmp.ne.s32.totalorder %s163, %s164
    %p176 = scmp.eq.s32.totalorder %s23, 1
    %p177 = por %p175, %p176
    %p179 = scmp.ne.s32.totalorder %s164, %s178
    %p180 = scmp.eq.s32.totalorder %s23, 0
    %p181 = por %p179, %p180
    %s183 = sadd.s32 %s182, 1
    %p186 = scmp.eq.s32.totalorder %s17, 1
    %p187 = scmp.ne.s32.totalorder %s182, %s184
    %p188 = scmp.eq.s32.totalorder %s17, 0
    %p189 = por %p187, %p188
    %p190 = scmp.ne.s32.totalorder %s182, %s184
    %p191 = scmp.eq.s32.totalorder %s22, 1
    %p192 = por %p190, %p191
    %p193 = scmp.ne.s32.totalorder %s184, %s185
    %p194 = scmp.eq.s32.totalorder %s22, 0
    %p195 = por %p193, %p194
    %p196 = scmp.ne.s32.totalorder %s184, %s185
    %p197 = scmp.eq.s32.totalorder %s23, 1
    %p198 = por %p196, %p197
    %p200 = scmp.ne.s32.totalorder %s185, %s199
    %p201 = scmp.eq.s32.totalorder %s23, 0
    %p202 = por %p200, %p201
    %s204 = sadd.s32 %s203, 1
    %p207 = scmp.eq.s32.totalorder %s17, 1
    %p208 = scmp.ne.s32.totalorder %s203, %s205
    %p209 = scmp.eq.s32.totalorder %s17, 0
    %p210 = por %p208, %p209
    %p211 = scmp.ne.s32.totalorder %s203, %s205
    %p212 = scmp.eq.s32.totalorder %s22, 1
    %p213 = por %p211, %p212
    %p214 = scmp.ne.s32.totalorder %s205, %s206
    %p215 = scmp.eq.s32.totalorder %s22, 0
    %p216 = por %p214, %p215
    %p217 = scmp.ne.s32.totalorder %s205, %s206
    %p218 = scmp.eq.s32.totalorder %s23, 1
    %p219 = por %p217, %p218
    %p221 = scmp.ne.s32.totalorder %s206, %s220
    %p222 = scmp.eq.s32.totalorder %s23, 0
    %p223 = por %p221, %p222
    %s225 = sadd.s32 %s224, 1
    %p228 = scmp.eq.s32.totalorder %s17, 1
    %p229 = scmp.ne.s32.totalorder %s224, %s226
    %p230 = scmp.eq.s32.totalorder %s17, 0
    %p231 = por %p229, %p230
    %p232 = scmp.ne.s32.totalorder %s224, %s226
    %p233 = scmp.eq.s32.totalorder %s22, 1
    %p234 = por %p232, %p233
    %p235 = scmp.ne.s32.totalorder %s226, %s227
    %p236 = scmp.eq.s32.totalorder %s22, 0
    %p237 = por %p235, %p236
    %p238 = scmp.ne.s32.totalorder %s226, %s227
    %p239 = scmp.eq.s32.totalorder %s23, 1
    %p240 = por %p238, %p239
    %p242 = scmp.ne.s32.totalorder %s227, %s241
    %p243 = scmp.eq.s32.totalorder %s23, 0
    %p244 = por %p242, %p243
    %s246 = sadd.s32 %s245, 1
    %p249 = scmp.eq.s32.totalorder %s17, 1
    %p250 = scmp.ne.s32.totalorder %s245, %s247
    %p251 = scmp.eq.s32.totalorder %s17, 0
    %p252 = por %p250, %p251
    %p253 = scmp.ne.s32.totalorder %s245, %s247
    %p254 = scmp.eq.s32.totalorder %s22, 1
    %p255 = por %p253, %p254
    %p256 = scmp.ne.s32.totalorder %s247, %s248
    %p257 = scmp.eq.s32.totalorder %s22, 0
    %p258 = por %p256, %p257
    %p259 = scmp.ne.s32.totalorder %s247, %s248
    %p260 = scmp.eq.s32.totalorder %s23, 1
    %p261 = por %p259, %p260
    %p263 = scmp.ne.s32.totalorder %s248, %s262
    %p264 = scmp.eq.s32.totalorder %s23, 0
    %p265 = por %p263, %p264
    %s266 = ssub.s32 %s17, %s24
    %p267 = scmp.eq.s32.totalorder %s266, 0
    %s269 = sadd.s32 %s268, 1
    %s270 = scalar_select %p267, %s268, %s269
    %p273 = pneg %p267
    %p274 = scmp.eq.s32.totalorder %s17, 1
    %p275 = por %p273, %p274
    %p276 = scmp.ne.s32.totalorder %s268, %s271
    %p277 = scmp.eq.s32.totalorder %s17, 0
    %p278 = por %p276, %p277
    %p279 = scmp.ne.s32.totalorder %s268, %s271
    %p280 = scmp.eq.s32.totalorder %s22, 1
    %p281 = por %p279, %p280
    %p282 = scmp.ne.s32.totalorder %s271, %s272
    %p283 = scmp.eq.s32.totalorder %s22, 0
    %p284 = por %p282, %p283
    %p285 = scmp.ne.s32.totalorder %s271, %s272
    %p286 = scmp.eq.s32.totalorder %s23, 1
    %p287 = por %p285, %p286
    %p289 = scmp.ne.s32.totalorder %s272, %s288
    %p290 = scmp.eq.s32.totalorder %s23, 0
    %p291 = por %p289, %p290
    %p292 = scmp.le.s32.totalorder 1, %s17
    %p293 = scmp.lt.s32.totalorder %s17, 3
    %p294 = pnand %p292, %p293
    %p295 = pneg %p294
    // Predicated region
    $region9: #{mdgcn_block_forward.1} parent=5 // pred_check
      _
    $region10: #{mdgcn_block_forward.1} parent=5 // pred_check_branch
      %297 = sbr.rel (%p294) target = $region12
    $region11: #{mdgcn_block_forward.1} parent=5 // pred_region
      %s298 = ssub.s32 %s17, 1
      // Predicated region
      $region13: #{mdgcn_block_forward.1} parent=11 // pred_check
        %p299 = pneg %p90
      $region14: #{mdgcn_block_forward.1} parent=11 // pred_check_branch
        %301 = sbr.rel (%p299) target = $region16
      $region15: #{mdgcn_block_forward.1} parent=11 // pred_region
        _
      $region16: #{mdgcn_block_forward.1} parent=11 // pred_fallthru
        _
      // Predicated region
      $region17: #{mdgcn_block_forward.1} parent=11 // pred_check
        %p302 = pneg %p111
      $region18: #{mdgcn_block_forward.1} parent=11 // pred_check_branch
        %304 = sbr.rel (%p302) target = $region20
      $region19: #{mdgcn_block_forward.1} parent=11 // pred_region
        _
      $region20: #{mdgcn_block_forward.1} parent=11 // pred_fallthru
        _
      // Predicated region
      $region21: #{mdgcn_block_forward.1} parent=11 // pred_check
        %p305 = pneg %p132
      $region22: #{mdgcn_block_forward.1} parent=11 // pred_check_branch
        %307 = sbr.rel (%p305) target = $region24
      $region23: #{mdgcn_block_forward.1} parent=11 // pred_region
        _
      $region24: #{mdgcn_block_forward.1} parent=11 // pred_fallthru
        _
      // Predicated region
      $region25: #{mdgcn_block_forward.1} parent=11 // pred_check
        %p308 = pneg %p153
      $region26: #{mdgcn_block_forward.1} parent=11 // pred_check_branch
        %310 = sbr.rel (%p308) target = $region28
      $region27: #{mdgcn_block_forward.1} parent=11 // pred_region
        _
      $region28: #{mdgcn_block_forward.1} parent=11 // pred_fallthru
        _
      // Predicated region
      $region29: #{mdgcn_block_forward.1} parent=11 // pred_check
        %p311 = pneg %p174
      $region30: #{mdgcn_block_forward.1} parent=11 // pred_check_branch
        %313 = sbr.rel (%p311) target = $region32
      $region31: #{mdgcn_block_forward.1} parent=11 // pred_region
        _
      $region32: #{mdgcn_block_forward.1} parent=11 // pred_fallthru
        _
      // Predicated region
      $region33: #{mdgcn_block_forward.1} parent=11 // pred_check
        %p314 = pneg %p195
      $region34: #{mdgcn_block_forward.1} parent=11 // pred_check_branch
        %316 = sbr.rel (%p314) target = $region36
      $region35: #{mdgcn_block_forward.1} parent=11 // pred_region
        _
      $region36: #{mdgcn_block_forward.1} parent=11 // pred_fallthru
        _
      // Predicated region
      $region37: #{mdgcn_block_forward.1} parent=11 // pred_check
        %p317 = pneg %p216
      $region38: #{mdgcn_block_forward.1} parent=11 // pred_check_branch
        %319 = sbr.rel (%p317) target = $region40
      $region39: #{mdgcn_block_forward.1} parent=11 // pred_region
        _
      $region40: #{mdgcn_block_forward.1} parent=11 // pred_fallthru
        _
      // Predicated region
      $region41: #{mdgcn_block_forward.1} parent=11 // pred_check
        %p320 = pneg %p237
      $region42: #{mdgcn_block_forward.1} parent=11 // pred_check_branch
        %322 = sbr.rel (%p320) target = $region44
      $region43: #{mdgcn_block_forward.1} parent=11 // pred_region
        _
      $region44: #{mdgcn_block_forward.1} parent=11 // pred_fallthru
        _
      // Predicated region
      $region45: #{mdgcn_block_forward.1} parent=11 // pred_check
        %p323 = pneg %p258
      $region46: #{mdgcn_block_forward.1} parent=11 // pred_check_branch
        %325 = sbr.rel (%p323) target = $region48
      $region47: #{mdgcn_block_forward.1} parent=11 // pred_region
        _
      $region48: #{mdgcn_block_forward.1} parent=11 // pred_fallthru
        _
    $region12: #{mdgcn_block_forward.1} parent=5 // pred_fallthru
      _
    %p326 = scmp.lt.s32.totalorder %s17, 2
    // Predicated region
    $region49: #{mdgcn_block_forward.1} parent=5 // pred_check
      %p327 = pneg %p326
    $region50: #{mdgcn_block_forward.1} parent=5 // pred_check_branch
      %329 = sbr.rel (%p327) target = $region52
    $region51: #{mdgcn_block_forward.1} parent=5 // pred_region
      // Predicated region
      $region53: #{mdgcn_block_forward.1} parent=51 // pred_check
        %p330 = pneg %p37
      $region54: #{mdgcn_block_forward.1} parent=51 // pred_check_branch
        %332 = sbr.rel (%p330) target = $region56
      $region55: #{mdgcn_block_forward.1} parent=51 // pred_region
        %p333 = scmp.lt.s32.totalorder %s17, 1
        %s334 = scalar_select %p333, %s17, 1
        %s335 = smul.addr %s334, 4
        %s336 = smul.addr %s335, 8
        %s337 = scalar_lea.vmem %s0, %s336
      $region56: #{mdgcn_block_forward.1} parent=51 // pred_fallthru
        _
      // Predicated region
      $region57: #{mdgcn_block_forward.1} parent=51 // pred_check
        %p338 = pneg %p63
      $region58: #{mdgcn_block_forward.1} parent=51 // pred_check_branch
        %340 = sbr.rel (%p338) target = $region60
      $region59: #{mdgcn_block_forward.1} parent=51 // pred_region
        %p341 = scmp.lt.s32.totalorder %s17, 1
        %s342 = scalar_select %p341, %s17, 1
        %s343 = smul.addr %s342, 4
        %s344 = smul.addr %s343, 8
        %s345 = scalar_lea.vmem %s1, %s344
      $region60: #{mdgcn_block_forward.1} parent=51 // pred_fallthru
        _
    $region52: #{mdgcn_block_forward.1} parent=5 // pred_fallthru
      _
    %p346 = scmp.le.s32.totalorder 1, %s17
    %p347 = scmp.lt.s32.totalorder %s17, 3
    %p348 = pnand %p346, %p347
    %p349 = pneg %p348
    // Predicated region
    $region61: #{mdgcn_block_forward.1} parent=5 // pred_check
      _
    $region62: #{mdgcn_block_forward.1} parent=5 // pred_check_branch
      %351 = sbr.rel (%p348) target = $region64
    $region63: #{mdgcn_block_forward.1} parent=5 // pred_region
      %s352 = ssub.s32 %s17, 1
      %p353 = scmp.lt.s32.totalorder %s22, 1
      %s354 = scalar_select %p353, %s22, 1
      %s355 = smul.addr %s354, 4
      %s356 = smul.addr %s355, 8
      %s357 = scalar_lea.vmem %s0, %s356
      %p358 = pneg %p43
      %p359 = pneg %p40
      %p360 = scmp.lt.s32.totalorder %s22, 1
      %s361 = scalar_select %p360, %s22, 1
      %s362 = smul.addr %s361, 4
      %s363 = smul.addr %s362, 8
      %s364 = scalar_lea.vmem %s1, %s363
      %p365 = pneg %p69
      %p366 = pneg %p66
      %p367 = pneg %p90
      %p368 = pneg %p87
      %p369 = pneg %p111
      %p370 = pneg %p108
      %p371 = pneg %p132
      %p372 = pneg %p129
      %p373 = pneg %p153
      %p374 = pneg %p150
      %p375 = pneg %p174
      %p376 = pneg %p171
      %p377 = pneg %p195
      %p378 = pneg %p192
      %p379 = pneg %p216
      %p380 = pneg %p213
      %p381 = pneg %p237
      %p382 = pneg %p234
      %p383 = pneg %p258
      %p384 = pneg %p255
      %p385 = pneg %p284
      %p386 = pneg %p281
      %p387 = scmp.lt.s32.totalorder %s22, 1
      %s388 = scalar_select %p387, %s22, 1
      %s389 = smul.addr %s388, 4
      %s390 = smul.addr %s389, 8
      %s391 = scalar_lea.vmem %s11, %s390
      %p392 = scmp.lt.s32.totalorder %s22, 1
      %s393 = scalar_select %p392, %s22, 1
      %s394 = smul.addr %s393, 4
      %s395 = smul.addr %s394, 8
      %s396 = scalar_lea.vmem %s0, %s395
      %p397 = scmp.lt.s32.totalorder %s22, 1
      %s398 = scalar_select %p397, %s22, 1
      %s399 = smul.addr %s398, 4
      %s400 = smul.addr %s399, 8
      %s401 = scalar_lea.vmem %s1, %s400
      %p402 = scmp.lt.s32.totalorder %s22, 1
      %s403 = scalar_select %p402, %s22, 1
      %s404 = smul.addr %s403, 4
      %s405 = smul.addr %s404, 8
      %s406 = scalar_lea.vmem %s11, %s405
      %v408 = vld [vmem:[%s396] sm:$0xff]
      %v409 = vld [vmem:[%s396 + $0x8] sm:$0xff]
      %v410 = vld [vmem:[%s396 + $0x10] sm:$0xff]
      %v411 = vld [vmem:[%s396 + $0x18] sm:$0xf]
      %vm412 = vcmask 261120
      %v414 = vsel %vm412, %v408, 0
      %v417 = vsel %vm412, %v409, 0
      %v420 = vsel %vm412, %v410, 0
      %v423 = vsel %vm412, %v411, 0
      %425 = vmatpush.xpose.msra.mxu0 0.0
      %426 = vmatpush.xpose.msra.mxu0 0.0
      %427 = vmatpush.xpose.msra.mxu0 0.0
      %428 = vmatpush.xpose.msra.mxu0 0.0
      %429 = vmatpush.xpose.msra.mxu0 0.0
      %430 = vmatpush.xpose.msra.mxu0 0.0
      %431 = vmatpush.xpose.msra.mxu0 0.0
      %432 = vmatpush.xpose.msra.mxu0 0.0
      %433 = vmatpush.xpose.msra.mxu0 0.0
      %434 = vmatpush.xpose.msra.mxu0 0.0
      %435 = vmatpush.xpose.msra.mxu0 0.0
      %436 = vmatpush.xpose.msra.mxu0 0.0
      %437 = vmatpush.xpose.msra.mxu0 %v423
      %438 = vmatpush.xpose.msra.mxu0 %v420
      %439 = vmatpush.xpose.msra.mxu0 %v417
      %440 = vmatpush.xpose.msra.mxu0 %v414
      %441 = vmatmul.f32.gmra.mxu0 %v414
      %v442 = vpop.f32.mrf.mxu0
      %v443 = vadd.f32 0.0, %v442
      %444 = vmatmul.f32.gmra.mxu0 %v417
      %v445 = vpop.f32.mrf.mxu0
      %v446 = vadd.f32 0.0, %v445
      %447 = vmatmul.f32.gmra.mxu0 %v420
      %v448 = vpop.f32.mrf.mxu0
      %v449 = vadd.f32 0.0, %v448
      %450 = vmatmul.f32.gmra.mxu0 %v423
      %v451 = vpop.f32.mrf.mxu0
      %v452 = vadd.f32 0.0, %v451
      %453 = vdwg.mxu0
      %v454 = vmul.f32 %v408, %v408
      %v455 = vmul.f32 %v409, %v409
      %v456 = vmul.f32 %v410, %v410
      %v457 = vmul.f32 %v411, %v411
      %v458 = vsel %vm412, %v454, 0.0
      %459 = vadd.xlane.f32.xlu0 %v458
      %v460 = vpop.xlane.xlu0 %459
      %v461 = vsel %vm412, %v455, 0.0
      %462 = vadd.xlane.f32.xlu0 %v461
      %v463 = vpop.xlane.xlu0 %462
      %v464 = vsel %vm412, %v456, 0.0
      %465 = vadd.xlane.f32.xlu0 %v464
      %v466 = vpop.xlane.xlu0 %465
      %vm467 = vcmask 257024
      %v468 = vsel %vm467, %v457, 0.0
      %469 = vadd.xlane.f32.xlu0 %v468
      %v470 = vpop.xlane.xlu0 %469
      %471 = vxpose.xlu0.b32.start [1/16] %v460, 128
      %472 = vxpose.xlu0.b32.cont [2/16] %v463, 128
      %473 = vxpose.xlu0.b32.cont [3/16] %v466, 128
      %474 = vxpose.xlu0.b32.cont [4/16] %v470, 128
      %475 = vxpose.xlu0.b32.cont [5/16] 0.0, 128
      %476 = vxpose.xlu0.b32.cont [6/16] 0.0, 128
      %477 = vxpose.xlu0.b32.cont [7/16] 0.0, 128
      %478 = vxpose.xlu0.b32.cont [8/16] 0.0, 128
      %479 = vxpose.xlu0.b32.cont [9/16] 0.0, 128
      %480 = vxpose.xlu0.b32.cont [10/16] 0.0, 128
      %481 = vxpose.xlu0.b32.cont [11/16] 0.0, 128
      %482 = vxpose.xlu0.b32.cont [12/16] 0.0, 128
      %483 = vxpose.xlu0.b32.cont [13/16] 0.0, 128
      %484 = vxpose.xlu0.b32.cont [14/16] 0.0, 128
      %485 = vxpose.xlu0.b32.cont [15/16] 0.0, 128
      %486 = vxpose.xlu0.b32.end [16/16] 0.0, 128
      %v487 = vpop.trf.xlu0
      %v488 = vpop.trf.xlu0
      %v489 = vpop.trf.xlu0
      %v490 = vpop.trf.xlu0
      %v491 = vpop.trf.xlu0
      %v492 = vpop.trf.xlu0
      %v493 = vpop.trf.xlu0
      %v494 = vpop.trf.xlu0
      %v495 = vpop.trf.xlu0
      %v496 = vpop.trf.xlu0
      %v497 = vpop.trf.xlu0
      %v498 = vpop.trf.xlu0
      %v499 = vpop.trf.xlu0
      %v500 = vpop.trf.xlu0
      %v501 = vpop.trf.xlu0
      %v502 = vpop.trf.xlu0
      %v503 = vmul.f32 %v443, 2.0
      %v504 = vmul.f32 %v446, 2.0
      %v505 = vmul.f32 %v449, 2.0
      %v506 = vmul.f32 %v452, 2.0
      %v507 = vperm.slane %v487, 0
      %v508 = vsub.f32 %v507, %v503
      %v509 = vsub.f32 %v507, %v504
      %v510 = vsub.f32 %v507, %v505
      %v511 = vsub.f32 %v507, %v506
      %v512 = vlaneseq
      %v513 = vand.u32 %v512, 127
      %v514 = vlaneseq
      %v515 = vshrl.u32 %v514, 7
      %v516 = vadd.s32 %v515, 8
      %v517 = vadd.s32 %v515, 16
      %v518 = vadd.s32 %v515, 24
      %vm519 = vcmp.lt.s32.totalorder %v515, 16
      %vm520 = vcmp.lt.s32.totalorder %v516, 16
      %vm521 = vcmp.lt.s32.totalorder %v517, 16
      %vm522 = vcmp.lt.s32.totalorder %v518, 16
      %vm523 = vcmp.lt.s32.totalorder %v513, 16
      %vm524 = vmxor %vm519, %vm523
      %vm525 = vmxor %vm520, %vm523
      %vm526 = vmxor %vm521, %vm523
      %vm527 = vmxor %vm522, %vm523
      %vm528 = vmxor %vm524, 1
      %vm529 = vmxor %vm525, 1
      %vm530 = vmxor %vm526, 1
      %vm531 = vmxor %vm527, 1
      %v532 = vsel %vm528, %v508, 3e+38
      %v533 = vsel %vm529, %v509, 3e+38
      %v534 = vsel %vm530, %v510, 3e+38
      %v535 = vsel %vm531, %v511, 3e+38
      %vm536 = vcmask 228352
      %v537 = vsel %vm536, %v532, inf
      %538 = vmin.xlane.f32.xlu0 %v537
      %v539 = vpop.xlane.xlu0 %538
      %v540 = vsel %vm536, %v533, inf
      %541 = vmin.xlane.f32.xlu0 %v540
      %v542 = vpop.xlane.xlu0 %541
      %v543 = vsel %vm536, %v534, inf
      %544 = vmin.xlane.f32.xlu0 %v543
      %v545 = vpop.xlane.xlu0 %544
      %vm546 = vcmask 224256
      %v547 = vsel %vm546, %v535, inf
      %548 = vmin.xlane.f32.xlu0 %v547
      %v549 = vpop.xlane.xlu0 %548
      %vm550 = vcmp.le.f32.partialorder %v532, %v539
      %vm551 = vcmp.le.f32.partialorder %v533, %v542
      %vm552 = vcmp.le.f32.partialorder %v534, %v545
      %vm553 = vcmp.le.f32.partialorder %v535, %v549
      %v554 = vsel %vm550, %v513, 28
      %v555 = vsel %vm551, %v513, 28
      %v556 = vsel %vm552, %v513, 28
      %v557 = vsel %vm553, %v513, 28
      %v558 = vsel %vm536, %v554, 2147483647
      %v559 = vand.u32 %v558, 65535
      %v560 = vshra.s32 %v558, 16
      %v561 = vcvt.s32.f32 %v559
      %v562 = vcvt.s32.f32 %v560
      %563 = vmin.xlane.f32.xlu0 %v562
      %v564 = vpop.xlane.xlu0 %563
      %vm565 = vcmp.eq.f32.partialorder %v562, %v564
      %v566 = vsel %vm565, %v561, inf
      %567 = vmin.xlane.f32.xlu0 %v566
      %v568 = vpop.xlane.xlu0 %567
      %v569 = vcvt.f32.s32 %v568
      %v570 = vcvt.f32.s32 %v564
      %v571 = vshll.u32 %v570, 16
      %v572 = vadd.s32 %v571, %v569
      %v573 = vsel %vm536, %v555, 2147483647
      %v574 = vand.u32 %v573, 65535
      %v575 = vshra.s32 %v573, 16
      %v576 = vcvt.s32.f32 %v574
      %v577 = vcvt.s32.f32 %v575
      %578 = vmin.xlane.f32.xlu0 %v577
      %v579 = vpop.xlane.xlu0 %578
      %vm580 = vcmp.eq.f32.partialorder %v577, %v579
      %v581 = vsel %vm580, %v576, inf
      %582 = vmin.xlane.f32.xlu0 %v581
      %v583 = vpop.xlane.xlu0 %582
      %v584 = vcvt.f32.s32 %v583
      %v585 = vcvt.f32.s32 %v579
      %v586 = vshll.u32 %v585, 16
      %v587 = vadd.s32 %v586, %v584
      %v588 = vsel %vm536, %v556, 2147483647
      %v589 = vand.u32 %v588, 65535
      %v590 = vshra.s32 %v588, 16
      %v591 = vcvt.s32.f32 %v589
      %v592 = vcvt.s32.f32 %v590
      %593 = vmin.xlane.f32.xlu0 %v592
      %v594 = vpop.xlane.xlu0 %593
      %vm595 = vcmp.eq.f32.partialorder %v592, %v594
      %v596 = vsel %vm595, %v591, inf
      %597 = vmin.xlane.f32.xlu0 %v596
      %v598 = vpop.xlane.xlu0 %597
      %v599 = vcvt.f32.s32 %v598
      %v600 = vcvt.f32.s32 %v594
      %v601 = vshll.u32 %v600, 16
      %v602 = vadd.s32 %v601, %v599
      %v603 = vsel %vm546, %v557, 2147483647
      %v604 = vand.u32 %v603, 65535
      %v605 = vshra.s32 %v603, 16
      %v606 = vcvt.s32.f32 %v604
      %v607 = vcvt.s32.f32 %v605
      %608 = vmin.xlane.f32.xlu0 %v607
      %v609 = vpop.xlane.xlu0 %608
      %vm610 = vcmp.eq.f32.partialorder %v607, %v609
      %v611 = vsel %vm610, %v606, inf
      %612 = vmin.xlane.f32.xlu0 %v611
      %v613 = vpop.xlane.xlu0 %612
      %v614 = vcvt.f32.s32 %v613
      %v615 = vcvt.f32.s32 %v609
      %v616 = vshll.u32 %v615, 16
      %v617 = vadd.s32 %v616, %v614
      %vm618 = vcmp.eq.s32.totalorder %v513, %v572
      %vm619 = vcmp.eq.s32.totalorder %v513, %v587
      %vm620 = vcmp.eq.s32.totalorder %v513, %v602
      %vm621 = vcmp.eq.s32.totalorder %v513, %v617
      %v622 = vsel %vm618, 1, 0
      %v623 = vsel %vm619, 1, 0
      %v624 = vsel %vm620, 1, 0
      %v625 = vsel %vm621, 1, 0
      %v626 = vcvt.s32.f32 %v622
      %v627 = vcvt.s32.f32 %v623
      %v628 = vcvt.s32.f32 %v624
      %v629 = vcvt.s32.f32 %v625
      %v630 = vsel %vm618, 3e+38, %v532
      %v631 = vsel %vm619, 3e+38, %v533
      %v632 = vsel %vm620, 3e+38, %v534
      %v633 = vsel %vm621, 3e+38, %v535
      %v634 = vsel %vm536, %v630, inf
      %635 = vmin.xlane.f32.xlu0 %v634
      %v636 = vpop.xlane.xlu0 %635
      %v637 = vsel %vm536, %v631, inf
      %638 = vmin.xlane.f32.xlu0 %v637
      %v639 = vpop.xlane.xlu0 %638
      %v640 = vsel %vm536, %v632, inf
      %641 = vmin.xlane.f32.xlu0 %v640
      %v642 = vpop.xlane.xlu0 %641
      %v643 = vsel %vm546, %v633, inf
      %644 = vmin.xlane.f32.xlu0 %v643
      %v645 = vpop.xlane.xlu0 %644
      %vm646 = vcmp.le.f32.partialorder %v630, %v636
      %vm647 = vcmp.le.f32.partialorder %v631, %v639
      %vm648 = vcmp.le.f32.partialorder %v632, %v642
      %vm649 = vcmp.le.f32.partialorder %v633, %v645
      %v650 = vsel %vm646, %v513, 28
      %v651 = vsel %vm647, %v513, 28
      %v652 = vsel %vm648, %v513, 28
      %v653 = vsel %vm649, %v513, 28
      %v654 = vsel %vm536, %v650, 2147483647
      %v655 = vand.u32 %v654, 65535
      %v656 = vshra.s32 %v654, 16
      %v657 = vcvt.s32.f32 %v655
      %v658 = vcvt.s32.f32 %v656
      %659 = vmin.xlane.f32.xlu0 %v658
      %v660 = vpop.xlane.xlu0 %659
      %vm661 = vcmp.eq.f32.partialorder %v658, %v660
      %v662 = vsel %vm661, %v657, inf
      %663 = vmin.xlane.f32.xlu0 %v662
      %v664 = vpop.xlane.xlu0 %663
      %v665 = vcvt.f32.s32 %v664
      %v666 = vcvt.f32.s32 %v660
      %v667 = vshll.u32 %v666, 16
      %v668 = vadd.s32 %v667, %v665
      %v669 = vsel %vm536, %v651, 2147483647
      %v670 = vand.u32 %v669, 65535
      %v671 = vshra.s32 %v669, 16
      %v672 = vcvt.s32.f32 %v670
      %v673 = vcvt.s32.f32 %v671
      %674 = vmin.xlane.f32.xlu0 %v673
      %v675 = vpop.xlane.xlu0 %674
      %vm676 = vcmp.eq.f32.partialorder %v673, %v675
      %v677 = vsel %vm676, %v672, inf
      %678 = vmin.xlane.f32.xlu0 %v677
      %v679 = vpop.xlane.xlu0 %678
      %v680 = vcvt.f32.s32 %v679
      %v681 = vcvt.f32.s32 %v675
      %v682 = vshll.u32 %v681, 16
      %v683 = vadd.s32 %v682, %v680
      %v684 = vsel %vm536, %v652, 2147483647
      %v685 = vand.u32 %v684, 65535
      %v686 = vshra.s32 %v684, 16
      %v687 = vcvt.s32.f32 %v685
      %v688 = vcvt.s32.f32 %v686
      %689 = vmin.xlane.f32.xlu0 %v688
      %v690 = vpop.xlane.xlu0 %689
      %vm691 = vcmp.eq.f32.partialorder %v688, %v690
      %v692 = vsel %vm691, %v687, inf
      %693 = vmin.xlane.f32.xlu0 %v692
      %v694 = vpop.xlane.xlu0 %693
      %v695 = vcvt.f32.s32 %v694
      %v696 = vcvt.f32.s32 %v690
      %v697 = vshll.u32 %v696, 16
      %v698 = vadd.s32 %v697, %v695
      %v699 = vsel %vm546, %v653, 2147483647
      %v700 = vand.u32 %v699, 65535
      %v701 = vshra.s32 %v699, 16
      %v702 = vcvt.s32.f32 %v700
      %v703 = vcvt.s32.f32 %v701
      %704 = vmin.xlane.f32.xlu0 %v703
      %v705 = vpop.xlane.xlu0 %704
      %vm706 = vcmp.eq.f32.partialorder %v703, %v705
      %v707 = vsel %vm706, %v702, inf
      %708 = vmin.xlane.f32.xlu0 %v707
      %v709 = vpop.xlane.xlu0 %708
      %v710 = vcvt.f32.s32 %v709
      %v711 = vcvt.f32.s32 %v705
      %v712 = vshll.u32 %v711, 16
      %v713 = vadd.s32 %v712, %v710
      %vm714 = vcmp.eq.s32.totalorder %v513, %v668
      %vm715 = vcmp.eq.s32.totalorder %v513, %v683
      %vm716 = vcmp.eq.s32.totalorder %v513, %v698
      %vm717 = vcmp.eq.s32.totalorder %v513, %v713
      %v718 = vsel %vm714, 1, 0
      %v719 = vsel %vm715, 1, 0
      %v720 = vsel %vm716, 1, 0
      %v721 = vsel %vm717, 1, 0
      %v722 = vcvt.s32.f32 %v718
      %v723 = vcvt.s32.f32 %v719
      %v724 = vcvt.s32.f32 %v720
      %v725 = vcvt.s32.f32 %v721
      %v726 = vsel %vm714, 3e+38, %v630
      %v727 = vsel %vm715, 3e+38, %v631
      %v728 = vsel %vm716, 3e+38, %v632
      %v729 = vsel %vm717, 3e+38, %v633
      %v730 = vsel %vm536, %v726, inf
      %731 = vmin.xlane.f32.xlu0 %v730
      %v732 = vpop.xlane.xlu0 %731
      %v733 = vsel %vm536, %v727, inf
      %734 = vmin.xlane.f32.xlu0 %v733
      %v735 = vpop.xlane.xlu0 %734
      %v736 = vsel %vm536, %v728, inf
      %737 = vmin.xlane.f32.xlu0 %v736
      %v738 = vpop.xlane.xlu0 %737
      %v739 = vsel %vm546, %v729, inf
      %740 = vmin.xlane.f32.xlu0 %v739
      %v741 = vpop.xlane.xlu0 %740
      %vm742 = vcmp.le.f32.partialorder %v726, %v732
      %vm743 = vcmp.le.f32.partialorder %v727, %v735
      %vm744 = vcmp.le.f32.partialorder %v728, %v738
      %vm745 = vcmp.le.f32.partialorder %v729, %v741
      %v746 = vsel %vm742, %v513, 28
      %v747 = vsel %vm743, %v513, 28
      %v748 = vsel %vm744, %v513, 28
      %v749 = vsel %vm745, %v513, 28
      %v750 = vsel %vm536, %v746, 2147483647
      %v751 = vand.u32 %v750, 65535
      %v752 = vshra.s32 %v750, 16
      %v753 = vcvt.s32.f32 %v751
      %v754 = vcvt.s32.f32 %v752
      %755 = vmin.xlane.f32.xlu0 %v754
      %v756 = vpop.xlane.xlu0 %755
      %vm757 = vcmp.eq.f32.partialorder %v754, %v756
      %v758 = vsel %vm757, %v753, inf
      %759 = vmin.xlane.f32.xlu0 %v758
      %v760 = vpop.xlane.xlu0 %759
      %v761 = vcvt.f32.s32 %v760
      %v762 = vcvt.f32.s32 %v756
      %v763 = vshll.u32 %v762, 16
      %v764 = vadd.s32 %v763, %v761
      %v765 = vsel %vm536, %v747, 2147483647
      %v766 = vand.u32 %v765, 65535
      %v767 = vshra.s32 %v765, 16
      %v768 = vcvt.s32.f32 %v766
      %v769 = vcvt.s32.f32 %v767
      %770 = vmin.xlane.f32.xlu0 %v769
      %v771 = vpop.xlane.xlu0 %770
      %vm772 = vcmp.eq.f32.partialorder %v769, %v771
      %v773 = vsel %vm772, %v768, inf
      %774 = vmin.xlane.f32.xlu0 %v773
      %v775 = vpop.xlane.xlu0 %774
      %v776 = vcvt.f32.s32 %v775
      %v777 = vcvt.f32.s32 %v771
      %v778 = vshll.u32 %v777, 16
      %v779 = vadd.s32 %v778, %v776
      %v780 = vsel %vm536, %v748, 2147483647
      %v781 = vand.u32 %v780, 65535
      %v782 = vshra.s32 %v780, 16
      %v783 = vcvt.s32.f32 %v781
      %v784 = vcvt.s32.f32 %v782
      %785 = vmin.xlane.f32.xlu0 %v784
      %v786 = vpop.xlane.xlu0 %785
      %vm787 = vcmp.eq.f32.partialorder %v784, %v786
      %v788 = vsel %vm787, %v783, inf
      %789 = vmin.xlane.f32.xlu0 %v788
      %v790 = vpop.xlane.xlu0 %789
      %v791 = vcvt.f32.s32 %v790
      %v792 = vcvt.f32.s32 %v786
      %v793 = vshll.u32 %v792, 16
      %v794 = vadd.s32 %v793, %v791
      %v795 = vsel %vm546, %v749, 2147483647
      %v796 = vand.u32 %v795, 65535
      %v797 = vshra.s32 %v795, 16
      %v798 = vcvt.s32.f32 %v796
      %v799 = vcvt.s32.f32 %v797
      %800 = vmin.xlane.f32.xlu0 %v799
      %v801 = vpop.xlane.xlu0 %800
      %vm802 = vcmp.eq.f32.partialorder %v799, %v801
      %v803 = vsel %vm802, %v798, inf
      %804 = vmin.xlane.f32.xlu0 %v803
      %v805 = vpop.xlane.xlu0 %804
      %v806 = vcvt.f32.s32 %v805
      %v807 = vcvt.f32.s32 %v801
      %v808 = vshll.u32 %v807, 16
      %v809 = vadd.s32 %v808, %v806
      %vm810 = vcmp.eq.s32.totalorder %v513, %v764
      %vm811 = vcmp.eq.s32.totalorder %v513, %v779
      %vm812 = vcmp.eq.s32.totalorder %v513, %v794
      %vm813 = vcmp.eq.s32.totalorder %v513, %v809
      %v814 = vsel %vm810, 1, 0
      %v815 = vsel %vm811, 1, 0
      %v816 = vsel %vm812, 1, 0
      %v817 = vsel %vm813, 1, 0
      %v818 = vcvt.s32.f32 %v814
      %v819 = vcvt.s32.f32 %v815
      %v820 = vcvt.s32.f32 %v816
      %v821 = vcvt.s32.f32 %v817
      %v822 = vsel %vm810, 3e+38, %v726
      %v823 = vsel %vm811, 3e+38, %v727
      %v824 = vsel %vm812, 3e+38, %v728
      %v825 = vsel %vm813, 3e+38, %v729
      %v826 = vsel %vm536, %v822, inf
      %827 = vmin.xlane.f32.xlu0 %v826
      %v828 = vpop.xlane.xlu0 %827
      %v829 = vsel %vm536, %v823, inf
      %830 = vmin.xlane.f32.xlu0 %v829
      %v831 = vpop.xlane.xlu0 %830
      %v832 = vsel %vm536, %v824, inf
      %833 = vmin.xlane.f32.xlu0 %v832
      %v834 = vpop.xlane.xlu0 %833
      %v835 = vsel %vm546, %v825, inf
      %836 = vmin.xlane.f32.xlu0 %v835
      %v837 = vpop.xlane.xlu0 %836
      %vm838 = vcmp.le.f32.partialorder %v822, %v828
      %vm839 = vcmp.le.f32.partialorder %v823, %v831
      %vm840 = vcmp.le.f32.partialorder %v824, %v834
      %vm841 = vcmp.le.f32.partialorder %v825, %v837
      %v842 = vsel %vm838, %v513, 28
      %v843 = vsel %vm839, %v513, 28
      %v844 = vsel %vm840, %v513, 28
      %v845 = vsel %vm841, %v513, 28
      %v846 = vsel %vm536, %v842, 2147483647
      %v847 = vand.u32 %v846, 65535
      %v848 = vshra.s32 %v846, 16
      %v849 = vcvt.s32.f32 %v847
      %v850 = vcvt.s32.f32 %v848
      %851 = vmin.xlane.f32.xlu0 %v850
      %v852 = vpop.xlane.xlu0 %851
      %vm853 = vcmp.eq.f32.partialorder %v850, %v852
      %v854 = vsel %vm853, %v849, inf
      %855 = vmin.xlane.f32.xlu0 %v854
      %v856 = vpop.xlane.xlu0 %855
      %v857 = vcvt.f32.s32 %v856
      %v858 = vcvt.f32.s32 %v852
      %v859 = vshll.u32 %v858, 16
      %v860 = vadd.s32 %v859, %v857
      %v861 = vsel %vm536, %v843, 2147483647
      %v862 = vand.u32 %v861, 65535
      %v863 = vshra.s32 %v861, 16
      %v864 = vcvt.s32.f32 %v862
      %v865 = vcvt.s32.f32 %v863
      %866 = vmin.xlane.f32.xlu0 %v865
      %v867 = vpop.xlane.xlu0 %866
      %vm868 = vcmp.eq.f32.partialorder %v865, %v867
      %v869 = vsel %vm868, %v864, inf
      %870 = vmin.xlane.f32.xlu0 %v869
      %v871 = vpop.xlane.xlu0 %870
      %v872 = vcvt.f32.s32 %v871
      %v873 = vcvt.f32.s32 %v867
      %v874 = vshll.u32 %v873, 16
      %v875 = vadd.s32 %v874, %v872
      %v876 = vsel %vm536, %v844, 2147483647
      %v877 = vand.u32 %v876, 65535
      %v878 = vshra.s32 %v876, 16
      %v879 = vcvt.s32.f32 %v877
      %v880 = vcvt.s32.f32 %v878
      %881 = vmin.xlane.f32.xlu0 %v880
      %v882 = vpop.xlane.xlu0 %881
      %vm883 = vcmp.eq.f32.partialorder %v880, %v882
      %v884 = vsel %vm883, %v879, inf
      %885 = vmin.xlane.f32.xlu0 %v884
      %v886 = vpop.xlane.xlu0 %885
      %v887 = vcvt.f32.s32 %v886
      %v888 = vcvt.f32.s32 %v882
      %v889 = vshll.u32 %v888, 16
      %v890 = vadd.s32 %v889, %v887
      %v891 = vsel %vm546, %v845, 2147483647
      %v892 = vand.u32 %v891, 65535
      %v893 = vshra.s32 %v891, 16
      %v894 = vcvt.s32.f32 %v892
      %v895 = vcvt.s32.f32 %v893
      %896 = vmin.xlane.f32.xlu0 %v895
      %v897 = vpop.xlane.xlu0 %896
      %vm898 = vcmp.eq.f32.partialorder %v895, %v897
      %v899 = vsel %vm898, %v894, inf
      %900 = vmin.xlane.f32.xlu0 %v899
      %v901 = vpop.xlane.xlu0 %900
      %v902 = vcvt.f32.s32 %v901
      %v903 = vcvt.f32.s32 %v897
      %v904 = vshll.u32 %v903, 16
      %v905 = vadd.s32 %v904, %v902
      %vm906 = vcmp.eq.s32.totalorder %v513, %v860
      %vm907 = vcmp.eq.s32.totalorder %v513, %v875
      %vm908 = vcmp.eq.s32.totalorder %v513, %v890
      %vm909 = vcmp.eq.s32.totalorder %v513, %v905
      %v910 = vsel %vm906, 1, 0
      %v911 = vsel %vm907, 1, 0
      %v912 = vsel %vm908, 1, 0
      %v913 = vsel %vm909, 1, 0
      %v914 = vcvt.s32.f32 %v910
      %v915 = vcvt.s32.f32 %v911
      %v916 = vcvt.s32.f32 %v912
      %v917 = vcvt.s32.f32 %v913
      %v918 = vsel %vm528, 3e+38, %v508
      %v919 = vsel %vm529, 3e+38, %v509
      %v920 = vsel %vm530, 3e+38, %v510
      %v921 = vsel %vm531, 3e+38, %v511
      %v922 = vsel %vm536, %v918, inf
      %923 = vmin.xlane.f32.xlu0 %v922
      %v924 = vpop.xlane.xlu0 %923
      %v925 = vsel %vm536, %v919, inf
      %926 = vmin.xlane.f32.xlu0 %v925
      %v927 = vpop.xlane.xlu0 %926
      %v928 = vsel %vm536, %v920, inf
      %929 = vmin.xlane.f32.xlu0 %v928
      %v930 = vpop.xlane.xlu0 %929
      %v931 = vsel %vm546, %v921, inf
      %932 = vmin.xlane.f32.xlu0 %v931
      %v933 = vpop.xlane.xlu0 %932
      %vm934 = vcmp.le.f32.partialorder %v918, %v924
      %vm935 = vcmp.le.f32.partialorder %v919, %v927
      %vm936 = vcmp.le.f32.partialorder %v920, %v930
      %vm937 = vcmp.le.f32.partialorder %v921, %v933
      %v938 = vsel %vm934, %v513, 28
      %v939 = vsel %vm935, %v513, 28
      %v940 = vsel %vm936, %v513, 28
      %v941 = vsel %vm937, %v513, 28
      %v942 = vsel %vm536, %v938, 2147483647
      %v943 = vand.u32 %v942, 65535
      %v944 = vshra.s32 %v942, 16
      %v945 = vcvt.s32.f32 %v943
      %v946 = vcvt.s32.f32 %v944
      %947 = vmin.xlane.f32.xlu0 %v946
      %v948 = vpop.xlane.xlu0 %947
      %vm949 = vcmp.eq.f32.partialorder %v946, %v948
      %v950 = vsel %vm949, %v945, inf
      %951 = vmin.xlane.f32.xlu0 %v950
      %v952 = vpop.xlane.xlu0 %951
      %v953 = vcvt.f32.s32 %v952
      %v954 = vcvt.f32.s32 %v948
      %v955 = vshll.u32 %v954, 16
      %v956 = vadd.s32 %v955, %v953
      %v957 = vsel %vm536, %v939, 2147483647
      %v958 = vand.u32 %v957, 65535
      %v959 = vshra.s32 %v957, 16
      %v960 = vcvt.s32.f32 %v958
      %v961 = vcvt.s32.f32 %v959
      %962 = vmin.xlane.f32.xlu0 %v961
      %v963 = vpop.xlane.xlu0 %962
      %vm964 = vcmp.eq.f32.partialorder %v961, %v963
      %v965 = vsel %vm964, %v960, inf
      %966 = vmin.xlane.f32.xlu0 %v965
      %v967 = vpop.xlane.xlu0 %966
      %v968 = vcvt.f32.s32 %v967
      %v969 = vcvt.f32.s32 %v963
      %v970 = vshll.u32 %v969, 16
      %v971 = vadd.s32 %v970, %v968
      %v972 = vsel %vm536, %v940, 2147483647
      %v973 = vand.u32 %v972, 65535
      %v974 = vshra.s32 %v972, 16
      %v975 = vcvt.s32.f32 %v973
      %v976 = vcvt.s32.f32 %v974
      %977 = vmin.xlane.f32.xlu0 %v976
      %v978 = vpop.xlane.xlu0 %977
      %vm979 = vcmp.eq.f32.partialorder %v976, %v978
      %v980 = vsel %vm979, %v975, inf
      %981 = vmin.xlane.f32.xlu0 %v980
      %v982 = vpop.xlane.xlu0 %981
      %v983 = vcvt.f32.s32 %v982
      %v984 = vcvt.f32.s32 %v978
      %v985 = vshll.u32 %v984, 16
      %v986 = vadd.s32 %v985, %v983
      %v987 = vsel %vm546, %v941, 2147483647
      %v988 = vand.u32 %v987, 65535
      %v989 = vshra.s32 %v987, 16
      %v990 = vcvt.s32.f32 %v988
      %v991 = vcvt.s32.f32 %v989
      %992 = vmin.xlane.f32.xlu0 %v991
      %v993 = vpop.xlane.xlu0 %992
      %vm994 = vcmp.eq.f32.partialorder %v991, %v993
      %v995 = vsel %vm994, %v990, inf
      %996 = vmin.xlane.f32.xlu0 %v995
      %v997 = vpop.xlane.xlu0 %996
      %v998 = vcvt.f32.s32 %v997
      %v999 = vcvt.f32.s32 %v993
      %v1000 = vshll.u32 %v999, 16
      %v1001 = vadd.s32 %v1000, %v998
      %vm1002 = vcmp.eq.s32.totalorder %v513, %v956
      %vm1003 = vcmp.eq.s32.totalorder %v513, %v971
      %vm1004 = vcmp.eq.s32.totalorder %v513, %v986
      %vm1005 = vcmp.eq.s32.totalorder %v513, %v1001
      %v1006 = vsel %vm1002, 1, 0
      %v1007 = vsel %vm1003, 1, 0
      %v1008 = vsel %vm1004, 1, 0
      %v1009 = vsel %vm1005, 1, 0
      %v1010 = vcvt.s32.f32 %v1006
      %v1011 = vcvt.s32.f32 %v1007
      %v1012 = vcvt.s32.f32 %v1008
      %v1013 = vcvt.s32.f32 %v1009
      %v1014 = vsel %vm1002, 3e+38, %v918
      %v1015 = vsel %vm1003, 3e+38, %v919
      %v1016 = vsel %vm1004, 3e+38, %v920
      %v1017 = vsel %vm1005, 3e+38, %v921
      %v1018 = vsel %vm536, %v1014, inf
      %1019 = vmin.xlane.f32.xlu0 %v1018
      %v1020 = vpop.xlane.xlu0 %1019
      %v1021 = vsel %vm536, %v1015, inf
      %1022 = vmin.xlane.f32.xlu0 %v1021
      %v1023 = vpop.xlane.xlu0 %1022
      %v1024 = vsel %vm536, %v1016, inf
      %1025 = vmin.xlane.f32.xlu0 %v1024
      %v1026 = vpop.xlane.xlu0 %1025
      %v1027 = vsel %vm546, %v1017, inf
      %1028 = vmin.xlane.f32.xlu0 %v1027
      %v1029 = vpop.xlane.xlu0 %1028
      %vm1030 = vcmp.le.f32.partialorder %v1014, %v1020
      %vm1031 = vcmp.le.f32.partialorder %v1015, %v1023
      %vm1032 = vcmp.le.f32.partialorder %v1016, %v1026
      %vm1033 = vcmp.le.f32.partialorder %v1017, %v1029
      %v1034 = vsel %vm1030, %v513, 28
      %v1035 = vsel %vm1031, %v513, 28
      %v1036 = vsel %vm1032, %v513, 28
      %v1037 = vsel %vm1033, %v513, 28
      %v1038 = vsel %vm536, %v1034, 2147483647
      %v1039 = vand.u32 %v1038, 65535
      %v1040 = vshra.s32 %v1038, 16
      %v1041 = vcvt.s32.f32 %v1039
      %v1042 = vcvt.s32.f32 %v1040
      %1043 = vmin.xlane.f32.xlu0 %v1042
      %v1044 = vpop.xlane.xlu0 %1043
      %vm1045 = vcmp.eq.f32.partialorder %v1042, %v1044
      %v1046 = vsel %vm1045, %v1041, inf
      %1047 = vmin.xlane.f32.xlu0 %v1046
      %v1048 = vpop.xlane.xlu0 %1047
      %v1049 = vcvt.f32.s32 %v1048
      %v1050 = vcvt.f32.s32 %v1044
      %v1051 = vshll.u32 %v1050, 16
      %v1052 = vadd.s32 %v1051, %v1049
      %v1053 = vsel %vm536, %v1035, 2147483647
      %v1054 = vand.u32 %v1053, 65535
      %v1055 = vshra.s32 %v1053, 16
      %v1056 = vcvt.s32.f32 %v1054
      %v1057 = vcvt.s32.f32 %v1055
      %1058 = vmin.xlane.f32.xlu0 %v1057
      %v1059 = vpop.xlane.xlu0 %1058
      %vm1060 = vcmp.eq.f32.partialorder %v1057, %v1059
      %v1061 = vsel %vm1060, %v1056, inf
      %1062 = vmin.xlane.f32.xlu0 %v1061
      %v1063 = vpop.xlane.xlu0 %1062
      %v1064 = vcvt.f32.s32 %v1063
      %v1065 = vcvt.f32.s32 %v1059
      %v1066 = vshll.u32 %v1065, 16
      %v1067 = vadd.s32 %v1066, %v1064
      %v1068 = vsel %vm536, %v1036, 2147483647
      %v1069 = vand.u32 %v1068, 65535
      %v1070 = vshra.s32 %v1068, 16
      %v1071 = vcvt.s32.f32 %v1069
      %v1072 = vcvt.s32.f32 %v1070
      %1073 = vmin.xlane.f32.xlu0 %v1072
      %v1074 = vpop.xlane.xlu0 %1073
      %vm1075 = vcmp.eq.f32.partialorder %v1072, %v1074
      %v1076 = vsel %vm1075, %v1071, inf
      %1077 = vmin.xlane.f32.xlu0 %v1076
      %v1078 = vpop.xlane.xlu0 %1077
      %v1079 = vcvt.f32.s32 %v1078
      %v1080 = vcvt.f32.s32 %v1074
      %v1081 = vshll.u32 %v1080, 16
      %v1082 = vadd.s32 %v1081, %v1079
      %v1083 = vsel %vm546, %v1037, 2147483647
      %v1084 = vand.u32 %v1083, 65535
      %v1085 = vshra.s32 %v1083, 16
      %v1086 = vcvt.s32.f32 %v1084
      %v1087 = vcvt.s32.f32 %v1085
      %1088 = vmin.xlane.f32.xlu0 %v1087
      %v1089 = vpop.xlane.xlu0 %1088
      %vm1090 = vcmp.eq.f32.partialorder %v1087, %v1089
      %v1091 = vsel %vm1090, %v1086, inf
      %1092 = vmin.xlane.f32.xlu0 %v1091
      %v1093 = vpop.xlane.xlu0 %1092
      %v1094 = vcvt.f32.s32 %v1093
      %v1095 = vcvt.f32.s32 %v1089
      %v1096 = vshll.u32 %v1095, 16
      %v1097 = vadd.s32 %v1096, %v1094
      %vm1098 = vcmp.eq.s32.totalorder %v513, %v1052
      %vm1099 = vcmp.eq.s32.totalorder %v513, %v1067
      %vm1100 = vcmp.eq.s32.totalorder %v513, %v1082
      %vm1101 = vcmp.eq.s32.totalorder %v513, %v1097
      %v1102 = vsel %vm1098, 1, 0
      %v1103 = vsel %vm1099, 1, 0
      %v1104 = vsel %vm1100, 1, 0
      %v1105 = vsel %vm1101, 1, 0
      %v1106 = vcvt.s32.f32 %v1102
      %v1107 = vcvt.s32.f32 %v1103
      %v1108 = vcvt.s32.f32 %v1104
      %v1109 = vcvt.s32.f32 %v1105
      %v1111 = vsel %vm536, %v626, 0
      %v1114 = vsel %vm536, %v627, 0
      %v1117 = vsel %vm536, %v628, 0
      %v1120 = vsel %vm536, %v629, 0
      %vm1122 = vcmask 1043456
      %v1123 = vsel %vm1122, %v411, 0
      %1125 = vmatpush.msra.mxu0 0.0
      %1126 = vmatpush.msra.mxu0 0.0
      %1127 = vmatpush.msra.mxu0 0.0
      %1128 = vmatpush.msra.mxu0 0.0
      %1129 = vmatpush.msra.mxu0 0.0
      %1130 = vmatpush.msra.mxu0 0.0
      %1131 = vmatpush.msra.mxu0 0.0
      %1132 = vmatpush.msra.mxu0 0.0
      %1133 = vmatpush.msra.mxu0 0.0
      %1134 = vmatpush.msra.mxu0 0.0
      %1135 = vmatpush.msra.mxu0 0.0
      %1136 = vmatpush.msra.mxu0 0.0
      %1137 = vmatpush.msra.mxu0 %v1123
      %1138 = vmatpush.msra.mxu0 %v410
      %1139 = vmatpush.msra.mxu0 %v409
      %1140 = vmatpush.msra.mxu0 %v408
      %1141 = vmatmul.f32.gmra.mxu0 %v1111
      %v1142 = vpop.f32.mrf.mxu0
      %v1143 = vadd.f32 0.0, %v1142
      %1144 = vmatmul.f32.gmra.mxu0 %v1114
      %v1145 = vpop.f32.mrf.mxu0
      %v1146 = vadd.f32 0.0, %v1145
      %1147 = vmatmul.f32.gmra.mxu0 %v1117
      %v1148 = vpop.f32.mrf.mxu0
      %v1149 = vadd.f32 0.0, %v1148
      %1150 = vmatmul.f32.gmra.mxu0 %v1120
      %v1151 = vpop.f32.mrf.mxu0
      %v1152 = vadd.f32 0.0, %v1151
      %1153 = vdwg.mxu0
      %v1155 = vsel %vm536, %v722, 0
      %v1158 = vsel %vm536, %v723, 0
      %v1161 = vsel %vm536, %v724, 0
      %v1164 = vsel %vm536, %v725, 0
      %1166 = vmatpush.msra.mxu0 0.0
      %1167 = vmatpush.msra.mxu0 0.0
      %1168 = vmatpush.msra.mxu0 0.0
      %1169 = vmatpush.msra.mxu0 0.0
      %1170 = vmatpush.msra.mxu0 0.0
      %1171 = vmatpush.msra.mxu0 0.0
      %1172 = vmatpush.msra.mxu0 0.0
      %1173 = vmatpush.msra.mxu0 0.0
      %1174 = vmatpush.msra.mxu0 0.0
      %1175 = vmatpush.msra.mxu0 0.0
      %1176 = vmatpush.msra.mxu0 0.0
      %1177 = vmatpush.msra.mxu0 0.0
      %1178 = vmatpush.msra.mxu0 %v1123
      %1179 = vmatpush.msra.mxu0 %v410
      %1180 = vmatpush.msra.mxu0 %v409
      %1181 = vmatpush.msra.mxu0 %v408
      %1182 = vmatmul.f32.gmra.mxu0 %v1155
      %v1183 = vpop.f32.mrf.mxu0
      %v1184 = vadd.f32 0.0, %v1183
      %1185 = vmatmul.f32.gmra.mxu0 %v1158
      %v1186 = vpop.f32.mrf.mxu0
      %v1187 = vadd.f32 0.0, %v1186
      %1188 = vmatmul.f32.gmra.mxu0 %v1161
      %v1189 = vpop.f32.mrf.mxu0
      %v1190 = vadd.f32 0.0, %v1189
      %1191 = vmatmul.f32.gmra.mxu0 %v1164
      %v1192 = vpop.f32.mrf.mxu0
      %v1193 = vadd.f32 0.0, %v1192
      %1194 = vdwg.mxu0
      %v1195 = vmax.f32 %v1143, %v1184
      %v1196 = vmax.f32 %v1146, %v1187
      %v1197 = vmax.f32 %v1149, %v1190
      %v1198 = vmax.f32 %v1152, %v1193
      %v1200 = vsel %vm536, %v818, 0
      %v1203 = vsel %vm536, %v819, 0
      %v1206 = vsel %vm536, %v820, 0
      %v1209 = vsel %vm536, %v821, 0
      %1211 = vmatpush.msra.mxu0 0.0
      %1212 = vmatpush.msra.mxu0 0.0
      %1213 = vmatpush.msra.mxu0 0.0
      %1214 = vmatpush.msra.mxu0 0.0
      %1215 = vmatpush.msra.mxu0 0.0
      %1216 = vmatpush.msra.mxu0 0.0
      %1217 = vmatpush.msra.mxu0 0.0
      %1218 = vmatpush.msra.mxu0 0.0
      %1219 = vmatpush.msra.mxu0 0.0
      %1220 = vmatpush.msra.mxu0 0.0
      %1221 = vmatpush.msra.mxu0 0.0
      %1222 = vmatpush.msra.mxu0 0.0
      %1223 = vmatpush.msra.mxu0 %v1123
      %1224 = vmatpush.msra.mxu0 %v410
      %1225 = vmatpush.msra.mxu0 %v409
      %1226 = vmatpush.msra.mxu0 %v408
      %1227 = vmatmul.f32.gmra.mxu0 %v1200
      %v1228 = vpop.f32.mrf.mxu0
      %v1229 = vadd.f32 0.0, %v1228
      %1230 = vmatmul.f32.gmra.mxu0 %v1203
      %v1231 = vpop.f32.mrf.mxu0
      %v1232 = vadd.f32 0.0, %v1231
      %1233 = vmatmul.f32.gmra.mxu0 %v1206
      %v1234 = vpop.f32.mrf.mxu0
      %v1235 = vadd.f32 0.0, %v1234
      %1236 = vmatmul.f32.gmra.mxu0 %v1209
      %v1237 = vpop.f32.mrf.mxu0
      %v1238 = vadd.f32 0.0, %v1237
      %1239 = vdwg.mxu0
      %v1240 = vmax.f32 %v1195, %v1229
      %v1241 = vmax.f32 %v1196, %v1232
      %v1242 = vmax.f32 %v1197, %v1235
      %v1243 = vmax.f32 %v1198, %v1238
      %v1245 = vsel %vm536, %v914, 0
      %v1248 = vsel %vm536, %v915, 0
      %v1251 = vsel %vm536, %v916, 0
      %v1254 = vsel %vm536, %v917, 0
      %1256 = vmatpush.msra.mxu0 0.0
      %1257 = vmatpush.msra.mxu0 0.0
      %1258 = vmatpush.msra.mxu0 0.0
      %1259 = vmatpush.msra.mxu0 0.0
      %1260 = vmatpush.msra.mxu0 0.0
      %1261 = vmatpush.msra.mxu0 0.0
      %1262 = vmatpush.msra.mxu0 0.0
      %1263 = vmatpush.msra.mxu0 0.0
      %1264 = vmatpush.msra.mxu0 0.0
      %1265 = vmatpush.msra.mxu0 0.0
      %1266 = vmatpush.msra.mxu0 0.0
      %1267 = vmatpush.msra.mxu0 0.0
      %1268 = vmatpush.msra.mxu0 %v1123
      %1269 = vmatpush.msra.mxu0 %v410
      %1270 = vmatpush.msra.mxu0 %v409
      %1271 = vmatpush.msra.mxu0 %v408
      %1272 = vmatmul.f32.gmra.mxu0 %v1245
      %v1273 = vpop.f32.mrf.mxu0
      %v1274 = vadd.f32 0.0, %v1273
      %1275 = vmatmul.f32.gmra.mxu0 %v1248
      %v1276 = vpop.f32.mrf.mxu0
      %v1277 = vadd.f32 0.0, %v1276
      %1278 = vmatmul.f32.gmra.mxu0 %v1251
      %v1279 = vpop.f32.mrf.mxu0
      %v1280 = vadd.f32 0.0, %v1279
      %1281 = vmatmul.f32.gmra.mxu0 %v1254
      %v1282 = vpop.f32.mrf.mxu0
      %v1283 = vadd.f32 0.0, %v1282
      %1284 = vdwg.mxu0
      %v1285 = vmax.f32 %v1240, %v1274
      %v1286 = vmax.f32 %v1241, %v1277
      %v1287 = vmax.f32 %v1242, %v1280
      %v1288 = vmax.f32 %v1243, %v1283
      %v1290 = vsel %vm536, %v1010, 0
      %v1293 = vsel %vm536, %v1011, 0
      %v1296 = vsel %vm536, %v1012, 0
      %v1299 = vsel %vm536, %v1013, 0
      %1301 = vmatpush.msra.mxu0 0.0
      %1302 = vmatpush.msra.mxu0 0.0
      %1303 = vmatpush.msra.mxu0 0.0
      %1304 = vmatpush.msra.mxu0 0.0
      %1305 = vmatpush.msra.mxu0 0.0
      %1306 = vmatpush.msra.mxu0 0.0
      %1307 = vmatpush.msra.mxu0 0.0
      %1308 = vmatpush.msra.mxu0 0.0
      %1309 = vmatpush.msra.mxu0 0.0
      %1310 = vmatpush.msra.mxu0 0.0
      %1311 = vmatpush.msra.mxu0 0.0
      %1312 = vmatpush.msra.mxu0 0.0
      %1313 = vmatpush.msra.mxu0 %v1123
      %1314 = vmatpush.msra.mxu0 %v410
      %1315 = vmatpush.msra.mxu0 %v409
      %1316 = vmatpush.msra.mxu0 %v408
      %1317 = vmatmul.f32.gmra.mxu0 %v1290
      %v1318 = vpop.f32.mrf.mxu0
      %v1319 = vadd.f32 0.0, %v1318
      %1320 = vmatmul.f32.gmra.mxu0 %v1293
      %v1321 = vpop.f32.mrf.mxu0
      %v1322 = vadd.f32 0.0, %v1321
      %1323 = vmatmul.f32.gmra.mxu0 %v1296
      %v1324 = vpop.f32.mrf.mxu0
      %v1325 = vadd.f32 0.0, %v1324
      %1326 = vmatmul.f32.gmra.mxu0 %v1299
      %v1327 = vpop.f32.mrf.mxu0
      %v1328 = vadd.f32 0.0, %v1327
      %1329 = vdwg.mxu0
      %v1330 = vmax.f32 %v1285, %v1319
      %v1331 = vmax.f32 %v1286, %v1322
      %v1332 = vmax.f32 %v1287, %v1325
      %v1333 = vmax.f32 %v1288, %v1328
      %v1335 = vsel %vm536, %v1106, 0
      %v1338 = vsel %vm536, %v1107, 0
      %v1341 = vsel %vm536, %v1108, 0
      %v1344 = vsel %vm536, %v1109, 0
      %1346 = vmatpush.msra.mxu0 0.0
      %1347 = vmatpush.msra.mxu0 0.0
      %1348 = vmatpush.msra.mxu0 0.0
      %1349 = vmatpush.msra.mxu0 0.0
      %1350 = vmatpush.msra.mxu0 0.0
      %1351 = vmatpush.msra.mxu0 0.0
      %1352 = vmatpush.msra.mxu0 0.0
      %1353 = vmatpush.msra.mxu0 0.0
      %1354 = vmatpush.msra.mxu0 0.0
      %1355 = vmatpush.msra.mxu0 0.0
      %1356 = vmatpush.msra.mxu0 0.0
      %1357 = vmatpush.msra.mxu0 0.0
      %1358 = vmatpush.msra.mxu0 %v1123
      %1359 = vmatpush.msra.mxu0 %v410
      %1360 = vmatpush.msra.mxu0 %v409
      %1361 = vmatpush.msra.mxu0 %v408
      %1362 = vmatmul.f32.gmra.mxu0 %v1335
      %v1363 = vpop.f32.mrf.mxu0
      %v1364 = vadd.f32 0.0, %v1363
      %1365 = vmatmul.f32.gmra.mxu0 %v1338
      %v1366 = vpop.f32.mrf.mxu0
      %v1367 = vadd.f32 0.0, %v1366
      %1368 = vmatmul.f32.gmra.mxu0 %v1341
      %v1369 = vpop.f32.mrf.mxu0
      %v1370 = vadd.f32 0.0, %v1369
      %1371 = vmatmul.f32.gmra.mxu0 %v1344
      %v1372 = vpop.f32.mrf.mxu0
      %v1373 = vadd.f32 0.0, %v1372
      %1374 = vdwg.mxu0
      %v1375 = vmax.f32 %v1330, %v1364
      %v1376 = vmax.f32 %v1331, %v1367
      %v1377 = vmax.f32 %v1332, %v1370
      %v1378 = vmax.f32 %v1333, %v1373
      %v1379 = vld [vmem:[%s2] sm:$0xff]
      %v1380 = vld [vmem:[%s2 + $0x8] sm:$0xff]
      %v1381 = vld [vmem:[%s2 + $0x10] sm:$0xff]
      %v1382 = vld [vmem:[%s2 + $0x18] sm:$0xff]
      %v1383 = vpack.c.bf16 %v409, %v408
      %v1384 = vpack.c.bf16 %v411, %v410
      %v1385 = vpack.c.bf16 %v1380, %v1379
      %v1386 = vpack.c.bf16 %v1382, %v1381
      %v1387 = vld [vmem:[%s3] sm:$0xff]
      %v1388 = vld [vmem:[%s3 + $0x8] sm:$0xff]
      %v1389 = vld [vmem:[%s3 + $0x10] sm:$0xff]
      %v1390 = vld [vmem:[%s3 + $0x18] sm:$0xff]
      %v1391 = vpack.c.bf16 %v1376, %v1375
      %v1392 = vpack.c.bf16 %v1378, %v1377
      %v1393 = vpack.c.bf16 %v1388, %v1387
      %v1394 = vpack.c.bf16 %v1390, %v1389
      %v1396 = vsel %vm412, %v1391, 0
      %v1399 = vsel %vm412, %v1392, 0
      %1401 = vmatpush.bf16.msra.mxu0 0
      %1402 = vmatpush.bf16.msra.mxu0 0
      %1403 = vmatpush.bf16.msra.mxu0 0
      %1404 = vmatpush.bf16.msra.mxu0 0
      %1405 = vmatpush.bf16.msra.mxu0 0
      %1406 = vmatpush.bf16.msra.mxu0 0
      %1407 = vmatpush.bf16.msra.mxu0 %v1394
      %1408 = vmatpush.bf16.msra.mxu0 %v1393
      %1409 = vmatmul.bf16.gmra.mxu0 %v1396
      %v1410 = vpop.f32.mrf.mxu0
      %v1411 = vadd.f32 0.0, %v1410
      %v1412 = vpop.f32.mrf.mxu0
      %v1413 = vadd.f32 0.0, %v1412
      %1414 = vmatmul.bf16.gmra.mxu0 %v1399
      %v1415 = vpop.f32.mrf.mxu0
      %v1416 = vadd.f32 0.0, %v1415
      %v1417 = vpop.f32.mrf.mxu0
      %v1418 = vadd.f32 0.0, %v1417
      %1419 = vdwg.mxu0
      %v1421 = vsel %vm412, %v1383, 0
      %v1424 = vsel %vm412, %v1384, 0
      %1426 = vmatpush.bf16.msra.mxu0 0
      %1427 = vmatpush.bf16.msra.mxu0 0
      %1428 = vmatpush.bf16.msra.mxu0 0
      %1429 = vmatpush.bf16.msra.mxu0 0
      %1430 = vmatpush.bf16.msra.mxu0 0
      %1431 = vmatpush.bf16.msra.mxu0 0
      %1432 = vmatpush.bf16.msra.mxu0 %v1386
      %1433 = vmatpush.bf16.msra.mxu0 %v1385
      %1434 = vmatmul.bf16.gmra.mxu0 %v1421
      %v1435 = vpop.f32.mrf.mxu0
      %v1436 = vadd.f32 %v1411, %v1435
      %v1437 = vpop.f32.mrf.mxu0
      %v1438 = vadd.f32 %v1413, %v1437
      %1439 = vmatmul.bf16.gmra.mxu0 %v1424
      %v1440 = vpop.f32.mrf.mxu0
      %v1441 = vadd.f32 %v1416, %v1440
      %v1442 = vpop.f32.mrf.mxu0
      %v1443 = vadd.f32 %v1418, %v1442
      %1444 = vdwg.mxu0
      %v1445 = vld [vmem:[%s4] sm:$0x1]
      %v1447 = vperm.slane %v1445, 0
      %v1449 = vadd.f32 %v1436, %v1447
      %v1450 = vadd.f32 %v1438, %v1447
      %v1451 = vadd.f32 %v1441, %v1447
      %v1452 = vadd.f32 %v1443, %v1447
      %v1453 = vmul.f32 %v1449, 0.5
      %v1454 = vmul.f32 %v1450, 0.5
      %v1455 = vmul.f32 %v1451, 0.5
      %v1456 = vmul.f32 %v1452, 0.5
      %v1457 = vmul.f32 %v1449, 0.044715
      %v1458 = vmul.f32 %v1450, 0.044715
      %v1459 = vmul.f32 %v1451, 0.044715
      %v1460 = vmul.f32 %v1452, 0.044715
      %v1461 = vmul.f32 %v1457, %v1449
      %v1462 = vmul.f32 %v1458, %v1450
      %v1463 = vmul.f32 %v1459, %v1451
      %v1464 = vmul.f32 %v1460, %v1452
      %v1465 = vmul.f32 %v1461, %v1449
      %v1466 = vmul.f32 %v1462, %v1450
      %v1467 = vmul.f32 %v1463, %v1451
      %v1468 = vmul.f32 %v1464, %v1452
      %v1469 = vadd.f32 %v1449, %v1465
      %v1470 = vadd.f32 %v1450, %v1466
      %v1471 = vadd.f32 %v1451, %v1467
      %v1472 = vadd.f32 %v1452, %v1468
      %v1473 = vmul.f32 %v1469, 0.7978846
      %v1474 = vmul.f32 %v1470, 0.7978846
      %v1475 = vmul.f32 %v1471, 0.7978846
      %v1476 = vmul.f32 %v1472, 0.7978846
      %v1477 = vtanh.pop %v1473
      %v1478 = vtanh.pop %v1474
      %v1479 = vtanh.pop %v1475
      %v1480 = vtanh.pop %v1476
      %v1481 = vadd.f32 %v1477, 1.0
      %v1482 = vadd.f32 %v1478, 1.0
      %v1483 = vadd.f32 %v1479, 1.0
      %v1484 = vadd.f32 %v1480, 1.0
      %v1485 = vmul.f32 %v1453, %v1481
      %v1486 = vmul.f32 %v1454, %v1482
      %v1487 = vmul.f32 %v1455, %v1483
      %v1488 = vmul.f32 %v1456, %v1484
      %v1489 = vadd.f32 %v1485, %v408
      %v1490 = vadd.f32 %v1486, %v409
      %v1491 = vadd.f32 %v1487, %v410
      %v1492 = vadd.f32 %v1488, %v411
      %v1494 = vsel %vm1122, %v1492, 0
      %1496 = vmatpush.msra.mxu0 0.0
      %1497 = vmatpush.msra.mxu0 0.0
      %1498 = vmatpush.msra.mxu0 0.0
      %1499 = vmatpush.msra.mxu0 0.0
      %1500 = vmatpush.msra.mxu0 0.0
      %1501 = vmatpush.msra.mxu0 0.0
      %1502 = vmatpush.msra.mxu0 0.0
      %1503 = vmatpush.msra.mxu0 0.0
      %1504 = vmatpush.msra.mxu0 0.0
      %1505 = vmatpush.msra.mxu0 0.0
      %1506 = vmatpush.msra.mxu0 0.0
      %1507 = vmatpush.msra.mxu0 0.0
      %1508 = vmatpush.msra.mxu0 %v1494
      %1509 = vmatpush.msra.mxu0 %v1491
      %1510 = vmatpush.msra.mxu0 %v1490
      %1511 = vmatpush.msra.mxu0 %v1489
      %1512 = vmatmul.f32.gmra.mxu0 %v1111
      %v1513 = vpop.f32.mrf.mxu0
      %v1514 = vadd.f32 0.0, %v1513
      %1515 = vmatmul.f32.gmra.mxu0 %v1114
      %v1516 = vpop.f32.mrf.mxu0
      %v1517 = vadd.f32 0.0, %v1516
      %1518 = vmatmul.f32.gmra.mxu0 %v1117
      %v1519 = vpop.f32.mrf.mxu0
      %v1520 = vadd.f32 0.0, %v1519
      %1521 = vmatmul.f32.gmra.mxu0 %v1120
      %v1522 = vpop.f32.mrf.mxu0
      %v1523 = vadd.f32 0.0, %v1522
      %1524 = vdwg.mxu0
      %1525 = vmatpush.msra.mxu0 0.0
      %1526 = vmatpush.msra.mxu0 0.0
      %1527 = vmatpush.msra.mxu0 0.0
      %1528 = vmatpush.msra.mxu0 0.0
      %1529 = vmatpush.msra.mxu0 0.0
      %1530 = vmatpush.msra.mxu0 0.0
      %1531 = vmatpush.msra.mxu0 0.0
      %1532 = vmatpush.msra.mxu0 0.0
      %1533 = vmatpush.msra.mxu0 0.0
      %1534 = vmatpush.msra.mxu0 0.0
      %1535 = vmatpush.msra.mxu0 0.0
      %1536 = vmatpush.msra.mxu0 0.0
      %1537 = vmatpush.msra.mxu0 %v1494
      %1538 = vmatpush.msra.mxu0 %v1491
      %1539 = vmatpush.msra.mxu0 %v1490
      %1540 = vmatpush.msra.mxu0 %v1489
      %1541 = vmatmul.f32.gmra.mxu0 %v1155
      %v1542 = vpop.f32.mrf.mxu0
      %v1543 = vadd.f32 0.0, %v1542
      %1544 = vmatmul.f32.gmra.mxu0 %v1158
      %v1545 = vpop.f32.mrf.mxu0
      %v1546 = vadd.f32 0.0, %v1545
      %1547 = vmatmul.f32.gmra.mxu0 %v1161
      %v1548 = vpop.f32.mrf.mxu0
      %v1549 = vadd.f32 0.0, %v1548
      %1550 = vmatmul.f32.gmra.mxu0 %v1164
      %v1551 = vpop.f32.mrf.mxu0
      %v1552 = vadd.f32 0.0, %v1551
      %1553 = vdwg.mxu0
      %v1554 = vmax.f32 %v1514, %v1543
      %v1555 = vmax.f32 %v1517, %v1546
      %v1556 = vmax.f32 %v1520, %v1549
      %v1557 = vmax.f32 %v1523, %v1552
      %1558 = vmatpush.msra.mxu0 0.0
      %1559 = vmatpush.msra.mxu0 0.0
      %1560 = vmatpush.msra.mxu0 0.0
      %1561 = vmatpush.msra.mxu0 0.0
      %1562 = vmatpush.msra.mxu0 0.0
      %1563 = vmatpush.msra.mxu0 0.0
      %1564 = vmatpush.msra.mxu0 0.0
      %1565 = vmatpush.msra.mxu0 0.0
      %1566 = vmatpush.msra.mxu0 0.0
      %1567 = vmatpush.msra.mxu0 0.0
      %1568 = vmatpush.msra.mxu0 0.0
      %1569 = vmatpush.msra.mxu0 0.0
      %1570 = vmatpush.msra.mxu0 %v1494
      %1571 = vmatpush.msra.mxu0 %v1491
      %1572 = vmatpush.msra.mxu0 %v1490
      %1573 = vmatpush.msra.mxu0 %v1489
      %1574 = vmatmul.f32.gmra.mxu0 %v1200
      %v1575 = vpop.f32.mrf.mxu0
      %v1576 = vadd.f32 0.0, %v1575
      %1577 = vmatmul.f32.gmra.mxu0 %v1203
      %v1578 = vpop.f32.mrf.mxu0
      %v1579 = vadd.f32 0.0, %v1578
      %1580 = vmatmul.f32.gmra.mxu0 %v1206
      %v1581 = vpop.f32.mrf.mxu0
      %v1582 = vadd.f32 0.0, %v1581
      %1583 = vmatmul.f32.gmra.mxu0 %v1209
      %v1584 = vpop.f32.mrf.mxu0
      %v1585 = vadd.f32 0.0, %v1584
      %1586 = vdwg.mxu0
      %v1587 = vmax.f32 %v1554, %v1576
      %v1588 = vmax.f32 %v1555, %v1579
      %v1589 = vmax.f32 %v1556, %v1582
      %v1590 = vmax.f32 %v1557, %v1585
      %1591 = vmatpush.msra.mxu0 0.0
      %1592 = vmatpush.msra.mxu0 0.0
      %1593 = vmatpush.msra.mxu0 0.0
      %1594 = vmatpush.msra.mxu0 0.0
      %1595 = vmatpush.msra.mxu0 0.0
      %1596 = vmatpush.msra.mxu0 0.0
      %1597 = vmatpush.msra.mxu0 0.0
      %1598 = vmatpush.msra.mxu0 0.0
      %1599 = vmatpush.msra.mxu0 0.0
      %1600 = vmatpush.msra.mxu0 0.0
      %1601 = vmatpush.msra.mxu0 0.0
      %1602 = vmatpush.msra.mxu0 0.0
      %1603 = vmatpush.msra.mxu0 %v1494
      %1604 = vmatpush.msra.mxu0 %v1491
      %1605 = vmatpush.msra.mxu0 %v1490
      %1606 = vmatpush.msra.mxu0 %v1489
      %1607 = vmatmul.f32.gmra.mxu0 %v1245
      %v1608 = vpop.f32.mrf.mxu0
      %v1609 = vadd.f32 0.0, %v1608
      %1610 = vmatmul.f32.gmra.mxu0 %v1248
      %v1611 = vpop.f32.mrf.mxu0
      %v1612 = vadd.f32 0.0, %v1611
      %1613 = vmatmul.f32.gmra.mxu0 %v1251
      %v1614 = vpop.f32.mrf.mxu0
      %v1615 = vadd.f32 0.0, %v1614
      %1616 = vmatmul.f32.gmra.mxu0 %v1254
      %v1617 = vpop.f32.mrf.mxu0
      %v1618 = vadd.f32 0.0, %v1617
      %1619 = vdwg.mxu0
      %v1620 = vmax.f32 %v1587, %v1609
      %v1621 = vmax.f32 %v1588, %v1612
      %v1622 = vmax.f32 %v1589, %v1615
      %v1623 = vmax.f32 %v1590, %v1618
      %1624 = vmatpush.msra.mxu0 0.0
      %1625 = vmatpush.msra.mxu0 0.0
      %1626 = vmatpush.msra.mxu0 0.0
      %1627 = vmatpush.msra.mxu0 0.0
      %1628 = vmatpush.msra.mxu0 0.0
      %1629 = vmatpush.msra.mxu0 0.0
      %1630 = vmatpush.msra.mxu0 0.0
      %1631 = vmatpush.msra.mxu0 0.0
      %1632 = vmatpush.msra.mxu0 0.0
      %1633 = vmatpush.msra.mxu0 0.0
      %1634 = vmatpush.msra.mxu0 0.0
      %1635 = vmatpush.msra.mxu0 0.0
      %1636 = vmatpush.msra.mxu0 %v1494
      %1637 = vmatpush.msra.mxu0 %v1491
      %1638 = vmatpush.msra.mxu0 %v1490
      %1639 = vmatpush.msra.mxu0 %v1489
      %1640 = vmatmul.f32.gmra.mxu0 %v1290
      %v1641 = vpop.f32.mrf.mxu0
      %v1642 = vadd.f32 0.0, %v1641
      %1643 = vmatmul.f32.gmra.mxu0 %v1293
      %v1644 = vpop.f32.mrf.mxu0
      %v1645 = vadd.f32 0.0, %v1644
      %1646 = vmatmul.f32.gmra.mxu0 %v1296
      %v1647 = vpop.f32.mrf.mxu0
      %v1648 = vadd.f32 0.0, %v1647
      %1649 = vmatmul.f32.gmra.mxu0 %v1299
      %v1650 = vpop.f32.mrf.mxu0
      %v1651 = vadd.f32 0.0, %v1650
      %1652 = vdwg.mxu0
      %v1653 = vmax.f32 %v1620, %v1642
      %v1654 = vmax.f32 %v1621, %v1645
      %v1655 = vmax.f32 %v1622, %v1648
      %v1656 = vmax.f32 %v1623, %v1651
      %1657 = vmatpush.msra.mxu0 0.0
      %1658 = vmatpush.msra.mxu0 0.0
      %1659 = vmatpush.msra.mxu0 0.0
      %1660 = vmatpush.msra.mxu0 0.0
      %1661 = vmatpush.msra.mxu0 0.0
      %1662 = vmatpush.msra.mxu0 0.0
      %1663 = vmatpush.msra.mxu0 0.0
      %1664 = vmatpush.msra.mxu0 0.0
      %1665 = vmatpush.msra.mxu0 0.0
      %1666 = vmatpush.msra.mxu0 0.0
      %1667 = vmatpush.msra.mxu0 0.0
      %1668 = vmatpush.msra.mxu0 0.0
      %1669 = vmatpush.msra.mxu0 %v1494
      %1670 = vmatpush.msra.mxu0 %v1491
      %1671 = vmatpush.msra.mxu0 %v1490
      %1672 = vmatpush.msra.mxu0 %v1489
      %1673 = vmatmul.f32.gmra.mxu0 %v1335
      %v1674 = vpop.f32.mrf.mxu0
      %v1675 = vadd.f32 0.0, %v1674
      %1676 = vmatmul.f32.gmra.mxu0 %v1338
      %v1677 = vpop.f32.mrf.mxu0
      %v1678 = vadd.f32 0.0, %v1677
      %1679 = vmatmul.f32.gmra.mxu0 %v1341
      %v1680 = vpop.f32.mrf.mxu0
      %v1681 = vadd.f32 0.0, %v1680
      %1682 = vmatmul.f32.gmra.mxu0 %v1344
      %v1683 = vpop.f32.mrf.mxu0
      %v1684 = vadd.f32 0.0, %v1683
      %1685 = vdwg.mxu0
      %v1686 = vmax.f32 %v1653, %v1675
      %v1687 = vmax.f32 %v1654, %v1678
      %v1688 = vmax.f32 %v1655, %v1681
      %v1689 = vmax.f32 %v1656, %v1684
      %s1690 = scalar_lea.vmem %s2, 32
      %v1691 = vld [vmem:[%s1690] sm:$0xff]
      %v1692 = vld [vmem:[%s1690 + $0x8] sm:$0xff]
      %v1693 = vld [vmem:[%s1690 + $0x10] sm:$0xff]
      %v1694 = vld [vmem:[%s1690 + $0x18] sm:$0xff]
      %v1695 = vpack.c.bf16 %v1490, %v1489
      %v1696 = vpack.c.bf16 %v1492, %v1491
      %v1697 = vpack.c.bf16 %v1692, %v1691
      %v1698 = vpack.c.bf16 %v1694, %v1693
      %s1699 = scalar_lea.vmem %s3, 32
      %v1700 = vld [vmem:[%s1699] sm:$0xff]
      %v1701 = vld [vmem:[%s1699 + $0x8] sm:$0xff]
      %v1702 = vld [vmem:[%s1699 + $0x10] sm:$0xff]
      %v1703 = vld [vmem:[%s1699 + $0x18] sm:$0xff]
      %v1704 = vpack.c.bf16 %v1687, %v1686
      %v1705 = vpack.c.bf16 %v1689, %v1688
      %v1706 = vpack.c.bf16 %v1701, %v1700
      %v1707 = vpack.c.bf16 %v1703, %v1702
      %v1709 = vsel %vm412, %v1704, 0
      %v1712 = vsel %vm412, %v1705, 0
      %1714 = vmatpush.bf16.msra.mxu0 0
      %1715 = vmatpush.bf16.msra.mxu0 0
      %1716 = vmatpush.bf16.msra.mxu0 0
      %1717 = vmatpush.bf16.msra.mxu0 0
      %1718 = vmatpush.bf16.msra.mxu0 0
      %1719 = vmatpush.bf16.msra.mxu0 0
      %1720 = vmatpush.bf16.msra.mxu0 %v1707
      %1721 = vmatpush.bf16.msra.mxu0 %v1706
      %1722 = vmatmul.bf16.gmra.mxu0 %v1709
      %v1723 = vpop.f32.mrf.mxu0
      %v1724 = vadd.f32 0.0, %v1723
      %v1725 = vpop.f32.mrf.mxu0
      %v1726 = vadd.f32 0.0, %v1725
      %1727 = vmatmul.bf16.gmra.mxu0 %v1712
      %v1728 = vpop.f32.mrf.mxu0
      %v1729 = vadd.f32 0.0, %v1728
      %v1730 = vpop.f32.mrf.mxu0
      %v1731 = vadd.f32 0.0, %v1730
      %1732 = vdwg.mxu0
      %v1734 = vsel %vm412, %v1695, 0
      %v1737 = vsel %vm412, %v1696, 0
      %1739 = vmatpush.bf16.msra.mxu0 0
      %1740 = vmatpush.bf16.msra.mxu0 0
      %1741 = vmatpush.bf16.msra.mxu0 0
      %1742 = vmatpush.bf16.msra.mxu0 0
      %1743 = vmatpush.bf16.msra.mxu0 0
      %1744 = vmatpush.bf16.msra.mxu0 0
      %1745 = vmatpush.bf16.msra.mxu0 %v1698
      %1746 = vmatpush.bf16.msra.mxu0 %v1697
      %1747 = vmatmul.bf16.gmra.mxu0 %v1734
      %v1748 = vpop.f32.mrf.mxu0
      %v1749 = vadd.f32 %v1724, %v1748
      %v1750 = vpop.f32.mrf.mxu0
      %v1751 = vadd.f32 %v1726, %v1750
      %1752 = vmatmul.bf16.gmra.mxu0 %v1737
      %v1753 = vpop.f32.mrf.mxu0
      %v1754 = vadd.f32 %v1729, %v1753
      %v1755 = vpop.f32.mrf.mxu0
      %v1756 = vadd.f32 %v1731, %v1755
      %1757 = vdwg.mxu0
      %s1758 = scalar_lea.vmem %s4, 1
      %v1759 = vld [vmem:[%s1758] sm:$0x1]
      %v1761 = vperm.slane %v1759, 0
      %v1763 = vadd.f32 %v1749, %v1761
      %v1764 = vadd.f32 %v1751, %v1761
      %v1765 = vadd.f32 %v1754, %v1761
      %v1766 = vadd.f32 %v1756, %v1761
      %v1767 = vmul.f32 %v1763, 0.5
      %v1768 = vmul.f32 %v1764, 0.5
      %v1769 = vmul.f32 %v1765, 0.5
      %v1770 = vmul.f32 %v1766, 0.5
      %v1771 = vmul.f32 %v1763, 0.044715
      %v1772 = vmul.f32 %v1764, 0.044715
      %v1773 = vmul.f32 %v1765, 0.044715
      %v1774 = vmul.f32 %v1766, 0.044715
      %v1775 = vmul.f32 %v1771, %v1763
      %v1776 = vmul.f32 %v1772, %v1764
      %v1777 = vmul.f32 %v1773, %v1765
      %v1778 = vmul.f32 %v1774, %v1766
      %v1779 = vmul.f32 %v1775, %v1763
      %v1780 = vmul.f32 %v1776, %v1764
      %v1781 = vmul.f32 %v1777, %v1765
      %v1782 = vmul.f32 %v1778, %v1766
      %v1783 = vadd.f32 %v1763, %v1779
      %v1784 = vadd.f32 %v1764, %v1780
      %v1785 = vadd.f32 %v1765, %v1781
      %v1786 = vadd.f32 %v1766, %v1782
      %v1787 = vmul.f32 %v1783, 0.7978846
      %v1788 = vmul.f32 %v1784, 0.7978846
      %v1789 = vmul.f32 %v1785, 0.7978846
      %v1790 = vmul.f32 %v1786, 0.7978846
      %v1791 = vtanh.pop %v1787
      %v1792 = vtanh.pop %v1788
      %v1793 = vtanh.pop %v1789
      %v1794 = vtanh.pop %v1790
      %v1795 = vadd.f32 %v1791, 1.0
      %v1796 = vadd.f32 %v1792, 1.0
      %v1797 = vadd.f32 %v1793, 1.0
      %v1798 = vadd.f32 %v1794, 1.0
      %v1799 = vmul.f32 %v1767, %v1795
      %v1800 = vmul.f32 %v1768, %v1796
      %v1801 = vmul.f32 %v1769, %v1797
      %v1802 = vmul.f32 %v1770, %v1798
      %v1803 = vadd.f32 %v1799, %v1489
      %v1804 = vadd.f32 %v1800, %v1490
      %v1805 = vadd.f32 %v1801, %v1491
      %v1806 = vadd.f32 %v1802, %v1492
      %v1807 = vld [vmem:[%s5] sm:$0xff]
      %v1808 = vld [vmem:[%s5 + $0x8] sm:$0xff]
      %v1809 = vld [vmem:[%s5 + $0x10] sm:$0xff]
      %v1810 = vld [vmem:[%s5 + $0x18] sm:$0xff]
      %v1811 = vpack.c.bf16 %v1804, %v1803
      %v1812 = vpack.c.bf16 %v1806, %v1805
      %v1813 = vpack.c.bf16 %v1808, %v1807
      %v1814 = vpack.c.bf16 %v1810, %v1809
      %v1815 = vld [vmem:[%s6] sm:$0x1]
      %v1817 = vperm.slane %v1815, 0
      %v1820 = vsel %vm412, %v1811, 0
      %v1823 = vsel %vm412, %v1812, 0
      %1825 = vmatpush.bf16.msra.mxu0 0
      %1826 = vmatpush.bf16.msra.mxu0 0
      %1827 = vmatpush.bf16.msra.mxu0 0
      %1828 = vmatpush.bf16.msra.mxu0 0
      %1829 = vmatpush.bf16.msra.mxu0 0
      %1830 = vmatpush.bf16.msra.mxu0 0
      %1831 = vmatpush.bf16.msra.mxu0 %v1814
      %1832 = vmatpush.bf16.msra.mxu0 %v1813
      %1833 = vmatmul.bf16.gmra.mxu0 %v1820
      %v1834 = vpop.f32.mrf.mxu0
      %v1835 = vadd.f32 %v1817, %v1834
      %v1836 = vpop.f32.mrf.mxu0
      %v1837 = vadd.f32 %v1817, %v1836
      %1838 = vmatmul.bf16.gmra.mxu0 %v1823
      %v1839 = vpop.f32.mrf.mxu0
      %v1840 = vadd.f32 %v1817, %v1839
      %v1841 = vpop.f32.mrf.mxu0
      %v1842 = vadd.f32 %v1817, %v1841
      %1843 = vdwg.mxu0
      %v1844 = vadd.f32 %v1835, %v408
      %v1845 = vadd.f32 %v1837, %v409
      %v1846 = vadd.f32 %v1840, %v410
      %v1847 = vadd.f32 %v1842, %v411
      %v1848 = vld [vmem:[%s7] sm:$0xff]
      %v1849 = vld [vmem:[%s7 + $0x8] sm:$0xff]
      %v1850 = vld [vmem:[%s7 + $0x10] sm:$0xff]
      %v1851 = vld [vmem:[%s7 + $0x18] sm:$0xff]
      %v1852 = vpack.c.bf16 %v1845, %v1844
      %v1853 = vpack.c.bf16 %v1847, %v1846
      %v1854 = vpack.c.bf16 %v1849, %v1848
      %v1855 = vpack.c.bf16 %v1851, %v1850
      %v1856 = vld [vmem:[%s8] sm:$0x1]
      %v1858 = vperm.slane %v1856, 0
      %v1861 = vsel %vm412, %v1852, 0
      %v1864 = vsel %vm412, %v1853, 0
      %1866 = vmatpush.bf16.msra.mxu0 0
      %1867 = vmatpush.bf16.msra.mxu0 0
      %1868 = vmatpush.bf16.msra.mxu0 0
      %1869 = vmatpush.bf16.msra.mxu0 0
      %1870 = vmatpush.bf16.msra.mxu0 0
      %1871 = vmatpush.bf16.msra.mxu0 0
      %1872 = vmatpush.bf16.msra.mxu0 %v1855
      %1873 = vmatpush.bf16.msra.mxu0 %v1854
      %1874 = vmatmul.bf16.gmra.mxu0 %v1861
      %v1875 = vpop.f32.mrf.mxu0
      %v1876 = vadd.f32 %v1858, %v1875
      %v1877 = vpop.f32.mrf.mxu0
      %v1878 = vadd.f32 %v1858, %v1877
      %1879 = vmatmul.bf16.gmra.mxu0 %v1864
      %v1880 = vpop.f32.mrf.mxu0
      %v1881 = vadd.f32 %v1858, %v1880
      %v1882 = vpop.f32.mrf.mxu0
      %v1883 = vadd.f32 %v1858, %v1882
      %1884 = vdwg.mxu0
      %v1885 = vmul.f32 %v1876, 0.5
      %v1886 = vmul.f32 %v1878, 0.5
      %v1887 = vmul.f32 %v1881, 0.5
      %v1888 = vmul.f32 %v1883, 0.5
      %v1889 = vmul.f32 %v1876, 0.044715
      %v1890 = vmul.f32 %v1878, 0.044715
      %v1891 = vmul.f32 %v1881, 0.044715
      %v1892 = vmul.f32 %v1883, 0.044715
      %v1893 = vmul.f32 %v1889, %v1876
      %v1894 = vmul.f32 %v1890, %v1878
      %v1895 = vmul.f32 %v1891, %v1881
      %v1896 = vmul.f32 %v1892, %v1883
      %v1897 = vmul.f32 %v1893, %v1876
      %v1898 = vmul.f32 %v1894, %v1878
      %v1899 = vmul.f32 %v1895, %v1881
      %v1900 = vmul.f32 %v1896, %v1883
      %v1901 = vadd.f32 %v1876, %v1897
      %v1902 = vadd.f32 %v1878, %v1898
      %v1903 = vadd.f32 %v1881, %v1899
      %v1904 = vadd.f32 %v1883, %v1900
      %v1905 = vmul.f32 %v1901, 0.7978846
      %v1906 = vmul.f32 %v1902, 0.7978846
      %v1907 = vmul.f32 %v1903, 0.7978846
      %v1908 = vmul.f32 %v1904, 0.7978846
      %v1909 = vtanh.pop %v1905
      %v1910 = vtanh.pop %v1906
      %v1911 = vtanh.pop %v1907
      %v1912 = vtanh.pop %v1908
      %v1913 = vadd.f32 %v1909, 1.0
      %v1914 = vadd.f32 %v1910, 1.0
      %v1915 = vadd.f32 %v1911, 1.0
      %v1916 = vadd.f32 %v1912, 1.0
      %v1917 = vmul.f32 %v1885, %v1913
      %v1918 = vmul.f32 %v1886, %v1914
      %v1919 = vmul.f32 %v1887, %v1915
      %v1920 = vmul.f32 %v1888, %v1916
      %v1921 = vld [vmem:[%s9] sm:$0xff]
      %v1922 = vld [vmem:[%s9 + $0x8] sm:$0xff]
      %v1923 = vld [vmem:[%s9 + $0x10] sm:$0xff]
      %v1924 = vld [vmem:[%s9 + $0x18] sm:$0xff]
      %v1925 = vld [vmem:[%s9 + $0x20] sm:$0xff]
      %v1926 = vld [vmem:[%s9 + $0x28] sm:$0xff]
      %v1927 = vld [vmem:[%s9 + $0x30] sm:$0xff]
      %v1928 = vld [vmem:[%s9 + $0x38] sm:$0xff]
      %v1929 = vld [vmem:[%s9 + $0x40] sm:$0xff]
      %v1930 = vld [vmem:[%s9 + $0x48] sm:$0xff]
      %v1931 = vld [vmem:[%s9 + $0x50] sm:$0xff]
      %v1932 = vld [vmem:[%s9 + $0x58] sm:$0xff]
      %v1933 = vld [vmem:[%s9 + $0x60] sm:$0xff]
      %v1934 = vld [vmem:[%s9 + $0x68] sm:$0xff]
      %v1935 = vld [vmem:[%s9 + $0x70] sm:$0xff]
      %v1936 = vld [vmem:[%s9 + $0x78] sm:$0xff]
      %v1937 = vpack.c.bf16 %v1918, %v1917
      %v1938 = vpack.c.bf16 %v1920, %v1919
      %v1939 = vpack.c.bf16 %v1922, %v1921
      %v1940 = vpack.c.bf16 %v1924, %v1923
      %v1941 = vpack.c.bf16 %v1926, %v1925
      %v1942 = vpack.c.bf16 %v1928, %v1927
      %v1943 = vpack.c.bf16 %v1930, %v1929
      %v1944 = vpack.c.bf16 %v1932, %v1931
      %v1945 = vpack.c.bf16 %v1934, %v1933
      %v1946 = vpack.c.bf16 %v1936, %v1935
      %v1947 = vld [vmem:[%s10] sm:$0x1]
      %v1949 = vperm.slane %v1947, 0
      %1951 = vmatpush.bf16.msra.mxu0 %v1946
      %1952 = vmatpush.bf16.msra.mxu0 %v1945
      %1953 = vmatpush.bf16.msra.mxu0 %v1944
      %1954 = vmatpush.bf16.msra.mxu0 %v1943
      %1955 = vmatpush.bf16.msra.mxu0 %v1942
      %1956 = vmatpush.bf16.msra.mxu0 %v1941
      %1957 = vmatpush.bf16.msra.mxu0 %v1940
      %1958 = vmatpush.bf16.msra.mxu0 %v1939
      %1959 = vmatmul.bf16.gmra.mxu0 %v1937
      %v1960 = vpop.f32.mrf.mxu0
      %v1961 = vadd.f32 %v1949, %v1960
      %v1962 = vpop.f32.mrf.mxu0
      %v1963 = vadd.f32 %v1949, %v1962
      %1964 = vmatmul.bf16.gmra.mxu0 %v1938
      %v1965 = vpop.f32.mrf.mxu0
      %v1966 = vadd.f32 %v1949, %v1965
      %v1967 = vpop.f32.mrf.mxu0
      %v1968 = vadd.f32 %v1949, %v1967
      %1969 = vdwg.mxu0
      %v1970 = vmul.f32 %v1961, 0.5
      %v1971 = vmul.f32 %v1963, 0.5
      %v1972 = vmul.f32 %v1966, 0.5
      %v1973 = vmul.f32 %v1968, 0.5
      %v1974 = vmul.f32 %v1961, 0.044715
      %v1975 = vmul.f32 %v1963, 0.044715
      %v1976 = vmul.f32 %v1966, 0.044715
      %v1977 = vmul.f32 %v1968, 0.044715
      %v1978 = vmul.f32 %v1974, %v1961
      %v1979 = vmul.f32 %v1975, %v1963
      %v1980 = vmul.f32 %v1976, %v1966
      %v1981 = vmul.f32 %v1977, %v1968
      %v1982 = vmul.f32 %v1978, %v1961
      %v1983 = vmul.f32 %v1979, %v1963
      %v1984 = vmul.f32 %v1980, %v1966
      %v1985 = vmul.f32 %v1981, %v1968
      %v1986 = vadd.f32 %v1961, %v1982
      %v1987 = vadd.f32 %v1963, %v1983
      %v1988 = vadd.f32 %v1966, %v1984
      %v1989 = vadd.f32 %v1968, %v1985
      %v1990 = vmul.f32 %v1986, 0.7978846
      %v1991 = vmul.f32 %v1987, 0.7978846
      %v1992 = vmul.f32 %v1988, 0.7978846
      %v1993 = vmul.f32 %v1989, 0.7978846
      %v1994 = vtanh.pop %v1990
      %v1995 = vtanh.pop %v1991
      %v1996 = vtanh.pop %v1992
      %v1997 = vtanh.pop %v1993
      %v1998 = vadd.f32 %v1994, 1.0
      %v1999 = vadd.f32 %v1995, 1.0
      %v2000 = vadd.f32 %v1996, 1.0
      %v2001 = vadd.f32 %v1997, 1.0
      %v2002 = vmul.f32 %v1970, %v1998
      %v2003 = vmul.f32 %v1971, %v1999
      %v2004 = vmul.f32 %v1972, %v2000
      %v2005 = vmul.f32 %v1973, %v2001
      %v2006 = vadd.f32 %v2002, %v1844
      %v2007 = vadd.f32 %v2003, %v1845
      %v2008 = vadd.f32 %v2004, %v1846
      %v2009 = vadd.f32 %v2005, %v1847
      %v2010 = vld [vmem:[%s401] sm:$0xff]
      %v2011 = vld [vmem:[%s401 + $0x8] sm:$0xff]
      %v2012 = vld [vmem:[%s401 + $0x10] sm:$0xff]
      %v2013 = vld [vmem:[%s401 + $0x18] sm:$0xf]
      %2015 = vset.pattern.permute.xlu0 0
      %2016 = vperm.xlu0 %2015, %v2010
      %v2017 = vpop.permute.xlu0 %2016
      %2020 = vset.pattern.permute.xlu0 0
      %2021 = vperm.xlu0 %2020, %v2011
      %v2022 = vpop.permute.xlu0 %2021
      %2025 = vset.pattern.permute.xlu0 0
      %2026 = vperm.xlu0 %2025, %v2012
      %v2027 = vpop.permute.xlu0 %2026
      %2030 = vset.pattern.permute.xlu0 0
      %2031 = vperm.xlu0 %2030, %v2013
      %v2032 = vpop.permute.xlu0 %2031
      %v2034 = vmul.f32 %v2006, %v2017
      %v2035 = vmul.f32 %v2007, %v2022
      %v2036 = vmul.f32 %v2008, %v2027
      %v2037 = vmul.f32 %v2009, %v2032
      %2038 = vst.msk [vmem:[%s406] sm:$0xff] %vm412, %v2034
      %2039 = vst.msk [vmem:[%s406 + $0x8] sm:$0xff] %vm412, %v2035
      %2040 = vst.msk [vmem:[%s406 + $0x10] sm:$0xff] %vm412, %v2036
      %2041 = vst.msk [vmem:[%s406 + $0x18] sm:$0xf] %vm467, %v2037
      %p2042 = scmp.lt.s32.totalorder %s22, 1
      %s2043 = scalar_select %p2042, %s22, 1
      %s2044 = smul.addr %s2043, 4
      %s2045 = smul.addr %s2044, 8
      %s2046 = scalar_lea.vmem %s11, %s2045
      // Predicated region
      $region65: #{mdgcn_block_forward.1} parent=63 // pred_check
        %p2047 = pneg %p281
      $region66: #{mdgcn_block_forward.1} parent=63 // pred_check_branch
        %2049 = sbr.rel (%p2047) target = $region68
      $region67: #{mdgcn_block_forward.1} parent=63 // pred_region
        _
      $region68: #{mdgcn_block_forward.1} parent=63 // pred_fallthru
        _
    $region64: #{mdgcn_block_forward.1} parent=5 // pred_fallthru
      _
    %p2050 = scmp.le.s32.totalorder 2, %s17
    // Predicated region
    $region69: #{mdgcn_block_forward.1} parent=5 // pred_check
      %p2051 = pneg %p2050
    $region70: #{mdgcn_block_forward.1} parent=5 // pred_check_branch
      %2053 = sbr.rel (%p2051) target = $region72
    $region71: #{mdgcn_block_forward.1} parent=5 // pred_region
      %s2054 = ssub.s32 %s17, 2
      // Predicated region
      $region73: #{mdgcn_block_forward.1} parent=71 // pred_check
        %p2055 = pneg %p287
      $region74: #{mdgcn_block_forward.1} parent=71 // pred_check_branch
        %2057 = sbr.rel (%p2055) target = $region76
      $region75: #{mdgcn_block_forward.1} parent=71 // pred_region
        %p2058 = scmp.lt.s32.totalorder %s23, 1
        %s2059 = scalar_select %p2058, %s23, 1
        %s2060 = smul.addr %s2059, 4
        %s2061 = smul.addr %s2060, 8
        %s2062 = scalar_lea.vmem %s11, %s2061
      $region76: #{mdgcn_block_forward.1} parent=71 // pred_fallthru
        _
    $region72: #{mdgcn_block_forward.1} parent=5 // pred_fallthru
      _
  $region6: #{mdgcn_block_forward.1} parent=0 // loop_footer
    %s21 = sadd.s32 1, %s17
  $region7: #{mdgcn_block_forward.1} parent=0 // loop_footer_branch
    %16 = sbr.rel target = $region3
  $region8: #{mdgcn_block_forward.1} parent=0 // loop_exit
    _

</llo_original>
